<compile_context>
chip_gen: v6e
topology: v6e:2x2x1
jax: 0.10.0
libtpu: 0.0.40
codegen_flags: <defaults>
</compile_context>

<pallas_src>
import jax
import jax.numpy as jnp
from jax.experimental import pallas as pl
from jax.experimental.pallas import tpu as pltpu

BN_EPS = 1e-5
_F32_MIN = float(jnp.finfo(jnp.float32).min)


def _round_up(v, m):
    return (v + m - 1) // m * m


def _cdiv(a, b):
    return (a + b - 1) // b


def _mish(x):
    # mish(x) = x * tanh(softplus(x)) = x * (u^2 + 2u) / (u^2 + 2u + 2), u = e^x.
    # Clamp the exp argument; for x > 20 the ratio is 1 to f32 precision.
    u = jnp.exp(jnp.minimum(x, 20.0))
    num = u * (u + 2.0)
    t = num * pl.reciprocal(num + 2.0, approx=True)
    return x * jnp.where(x > 20.0, 1.0, t)


def _make_head_kernel(hw_total, hw_tile, hwp, acc_w, needs_mask):
    inv_hw = 1.0 / float(hw_total)
    n_chunks = hw_tile // acc_w
    last_base = hwp - hw_tile          # element offset of the last HW block (static)

    def kernel(x_ref,        # (b_tile, C, hw_tile) f32  (native layout, HW on lanes)
               w1m_ref,      # (C, hidden) bf16  (max half of folded w1)
               w1a_ref,      # (C, hidden) bf16  (avg half of folded w1)
               b1_ref,       # (1, hidden) f32   (folded bias)
               w2_ref,       # (hidden, n_pad) bf16 (folded, lane-padded)
               b2_ref,       # (1, n_pad) f32
               out_ref,      # (b_tile, n_pad) f32
               mx_acc,       # VMEM (b_tile, C, acc_w) f32  running max
               sm_acc):      # VMEM (b_tile, C, acc_w) f32  running sum
        hw_step = pl.program_id(1)
        last = pl.num_programs(1) - 1

        @pl.when(hw_step == 0)
        def _():
            mx_acc[...] = jnp.full(mx_acc.shape, _F32_MIN, jnp.float32)
            sm_acc[...] = jnp.zeros(sm_acc.shape, jnp.float32)

        def accumulate(mask_tail):
            # Fold the tile into the 128-lane-wide accumulators: pure elementwise
            # VALU work per chunk; the cross-lane reduce happens once at the end.
            for j in range(n_chunks):
                c = x_ref[:, :, j * acc_w:(j + 1) * acc_w]
                if mask_tail:
                    lane = jax.lax.broadcasted_iota(jnp.int32, c.shape, 2)
                    valid = (last_base + j * acc_w + lane) < hw_total
                    c_for_max = jnp.where(valid, c, _F32_MIN)
                else:
                    c_for_max = c
                mx_acc[...] = jnp.maximum(mx_acc[...], c_for_max)
                # HW zero-padding is sum-neutral; no mask needed for the sum.
                sm_acc[...] = sm_acc[...] + c

        if needs_mask:
            # Padding only lives in the last HW block -> mask only there.
            @pl.when(hw_step != last)
            def _():
                accumulate(False)

            @pl.when(hw_step == last)
            def _():
                accumulate(True)
        else:
            accumulate(False)

        # MLP tail only on the last spatial step (pooled features are ready).
        @pl.when(hw_step == last)
        def _():
            # Single cross-lane reduce of the accumulators -> (b_tile, C).
            mx = _mish(jnp.max(mx_acc[...], axis=-1))
            avg = _mish(jnp.sum(sm_acc[...], axis=-1) * inv_hw)

            # fastai AdaptiveConcatPool2d order is [max, avg]; the concat is
            # replaced by two accumulated matmuls against the split w1.
            # BN1 already folded into w1/b1.  Dropout: identity in eval mode.
            # TODO(synk): training-mode dropout (stateful PRNG masking) not implemented.
            h = jnp.dot(mx.astype(jnp.bfloat16), w1m_ref[...],
                        preferred_element_type=jnp.float32)
            h = h + jnp.dot(avg.astype(jnp.bfloat16), w1a_ref[...],
                            preferred_element_type=jnp.float32)
            h = _mish(h + b1_ref[...])

            # BN2 already folded into w2/b2.  Dropout: identity in eval mode.
            y = jnp.dot(h.astype(jnp.bfloat16), w2_ref[...],
                        preferred_element_type=jnp.float32)
            out_ref[...] = y + b2_ref[...]

    return kernel


def fold_bn_into_linears(params, nc, n_pad):
    """Fold eval-mode BN1d into the following Linear; split/pack for the kernel."""
    s1 = params["bn1_gamma"] * jax.lax.rsqrt(params["bn1_var"] + BN_EPS)   # (1, 2C)
    w1 = params["w1"] * s1.reshape(-1, 1)                                   # (2C, H)
    b1 = (params["bn1_beta"] - params["bn1_mean"] * s1) @ params["w1"] + params["b1"]

    s2 = params["bn2_gamma"] * jax.lax.rsqrt(params["bn2_var"] + BN_EPS)    # (1, H)
    w2 = params["w2"] * s2.reshape(-1, 1)                                   # (H, n)
    b2 = (params["bn2_beta"] - params["bn2_mean"] * s2) @ params["w2"] + params["b2"]

    n = w2.shape[1]
    w2 = jnp.pad(w2, ((0, 0), (0, n_pad - n)))
    b2 = jnp.pad(b2, ((0, 0), (0, n_pad - n)))

    # bf16 weights feed the MXU natively; biases / elementwise math stay f32.
    return (w1[:nc].astype(jnp.bfloat16),
            w1[nc:].astype(jnp.bfloat16),
            b1.astype(jnp.float32),
            w2.astype(jnp.bfloat16),
            b2.astype(jnp.float32))


def head_forward(x_nchw, params):
    """x_nchw: (B, nc, H, W) float32.  Returns (B, n) float32 (eval-mode Head)."""
    B, C, H, W = x_nchw.shape
    HW = H * W
    hidden = params["w1"].shape[1]
    n_out = params["w2"].shape[1]
    n_pad = _round_up(n_out, 128)

    # --- per-generation VMEM budget -----------------------------------------
    try:
        vmem_cap = int(pltpu.get_tpu_info().vmem_capacity_bytes)
    except Exception:
        vmem_cap = 64 << 20                       # conservative (v7x-sized) fallback
    x_budget = vmem_cap // 8                      # bytes per single x buffer

    # --- tile selection (native layout: HW on lanes, C on sublanes) ---------
    c_sub = _round_up(C, 8)                       # f32 sublane padding of C
    hw_lane = _round_up(HW, 128)                  # VMEM lane footprint of full HW

    if B >= 16:
        # >= 2 batch blocks so the "parallel" axis feeds both v7x TensorCores.
        b_des = min(64, _round_up(_cdiv(B, 2), 8))
    else:
        b_des = _round_up(B, 8)
    row_bytes = c_sub * hw_lane * 4               # VMEM bytes of one full-HW batch row
    b_fit = max(8, (x_budget // row_bytes) // 8 * 8)
    b_tile = max(8, min(b_des, b_fit, _round_up(B, 8)))
    Bp = _round_up(B, b_tile)

    fits_full = b_tile * row_bytes <= x_budget
    if fits_full and hw_lane <= 4096:
        hw_tile, HWp = HW, HW                     # whole HW per step, no padding
    else:
        cap_elems = min(hw_lane, 4096,
                        max(128, (x_budget // (b_tile * c_sub * 4)) // 128 * 128))
        n_steps = _cdiv(hw_lane, cap_elems)
        hw_tile = _round_up(_cdiv(HW, n_steps), 128)
        HWp = hw_tile * n_steps
    needs_mask = HWp != HW
    acc_w = 128 if hw_tile % 128 == 0 else hw_tile
    n_hw_steps = HWp // hw_tile

    # --- layout: NCHW -> (B, C, HW) is a free view (no HBM transpose pass) --
    x = x_nchw.reshape(B, C, HW)
    if Bp != B or HWp != HW:
        x = jnp.pad(x, ((0, Bp - B), (0, 0), (0, HWp - HW)))

    w1m, w1a, b1, w2, b2 = fold_bn_into_linears(params, C, n_pad)

    kernel = _make_head_kernel(HW, hw_tile, HWp, acc_w, needs_mask)
    grid = (Bp // b_tile, n_hw_steps)

    # --- VMEM accounting (double-buffered x; weights counted x2 for safety) -
    x_buf = b_tile * c_sub * _round_up(hw_tile, 128) * 4
    w_buf = (2 * _round_up(C, 16) * hidden + _round_up(hidden, 16) * n_pad) * 2
    bias_buf = 16 * (hidden + n_pad) * 4
    acc_buf = b_tile * c_sub * _round_up(acc_w, 128) * 4
    out_buf = b_tile * n_pad * 4
    est = 2 * x_buf + 2 * (w_buf + bias_buf) + 2 * out_buf + 2 * acc_buf + (2 << 20)
    vmem_limit = int(min(vmem_cap - (4 << 20), max(est, 32 << 20)))

    scratch = [pltpu.VMEM((b_tile, C, acc_w), jnp.float32),   # running max
               pltpu.VMEM((b_tile, C, acc_w), jnp.float32)]   # running sum

    def build_specs(single_buffer_weights):
        def const_spec(shape):
            imap = lambda b, h, _n=len(shape): (0,) * _n
            if single_buffer_weights:
                # Grid-invariant: fetch once, keep a single VMEM buffer.
                return pl.BlockSpec(shape, imap, pipeline_mode=pl.Buffered(1))
            return pl.BlockSpec(shape, imap)

        in_specs = [
            pl.BlockSpec((b_tile, C, hw_tile), lambda b, h: (b, 0, h)),
            const_spec((C, hidden)),
            const_spec((C, hidden)),
            const_spec((1, hidden)),
            const_spec((hidden, n_pad)),
            const_spec((1, n_pad)),
        ]
        out_spec = pl.BlockSpec((b_tile, n_pad), lambda b, h: (b, 0))
        return in_specs, out_spec

    def run(single_buffer_weights):
        in_specs, out_spec = build_specs(single_buffer_weights)
        return pl.pallas_call(
            kernel,
            out_shape=jax.ShapeDtypeStruct((Bp, n_pad), jnp.float32),
            grid_spec=pltpu.PrefetchScalarGridSpec(
                num_scalar_prefetch=0,
                grid=grid,
                in_specs=in_specs,
                out_specs=out_spec,
                scratch_shapes=scratch),
            compiler_params=pltpu.CompilerParams(
                dimension_semantics=("parallel", "arbitrary"),
                vmem_limit_bytes=vmem_limit),
        )(x, w1m, w1a, b1, w2, b2)

    try:
        out = run(True)            # single-buffered invariant weights
    except Exception:              # fallback if pipeline_mode/Buffered unsupported
        out = run(False)

    return out[:B, :n_out]


def head_reference(x_nchw, params):
    """Pure-JAX f32 reference with the original (unfused) op order."""
    B, C, H, W = x_nchw.shape
    x = x_nchw.reshape(B, C, H * W)
    feat = jnp.concatenate([jnp.max(x, axis=-1), jnp.mean(x, axis=-1)], axis=1)

    def mish(v):
        return v * jnp.tanh(jax.nn.softplus(v))

    feat = mish(feat)
    feat = (feat - params["bn1_mean"]) * jax.lax.rsqrt(params["bn1_var"] + BN_EPS)
    feat = feat * params["bn1_gamma"] + params["bn1_beta"]
    h = feat @ params["w1"] + params["b1"]
    h = mish(h)
    h = (h - params["bn2_mean"]) * jax.lax.rsqrt(params["bn2_var"] + BN_EPS)
    h = h * params["bn2_gamma"] + params["bn2_beta"]
    return h @ params["w2"] + params["b2"]


def init_params(key, nc, n, hidden=512):
    """Deterministic parameter init mirroring the module's __init__ shapes."""
    k1, k2, k3, k4, k5, k6 = jax.random.split(key, 6)
    c2 = 2 * nc
    f32 = jnp.float32
    return {
        # BatchNorm1d(2*nc): weight=1, bias=0, running stats (mean, var)
        "bn1_gamma": jnp.ones((1, c2), f32),
        "bn1_beta":  jnp.zeros((1, c2), f32),
        "bn1_mean":  0.1 * jax.random.normal(k5, (1, c2), f32),
        "bn1_var":   jnp.abs(jax.random.normal(k6, (1, c2), f32)) + 0.5,
        # Linear(2*nc, 512)
        "w1": jax.random.normal(k1, (c2, hidden), f32) * (1.0 / jnp.sqrt(c2)),
        "b1": jax.random.normal(k2, (1, hidden), f32) * 0.01,
        # BatchNorm1d(512)
        "bn2_gamma": jnp.ones((1, hidden), f32),
        "bn2_beta":  jnp.zeros((1, hidden), f32),
        "bn2_mean":  jnp.zeros((1, hidden), f32),
        "bn2_var":   jnp.ones((1, hidden), f32),
        # Linear(512, n)
        "w2": jax.random.normal(k3, (hidden, n), f32) * (1.0 / jnp.sqrt(hidden)),
        "b2": jax.random.normal(k4, (1, n), f32) * 0.01,
    }


if __name__ == "__main__":
    B, nc, H, W = 2, 4, 16, 16
    n_classes = 10

    key = jax.random.PRNGKey(0)
    kx, kp = jax.random.split(key)
    x = jax.random.normal(kx, (B, nc, H, W), jnp.float32)
    params = init_params(kp, nc, n_classes)

    out = jax.block_until_ready(head_forward(x, params))
    assert out.shape == (B, n_classes), out.shape
    assert bool(jnp.all(jnp.isfinite(out)))

    ref = head_reference(x, params)
    max_err = float(jnp.max(jnp.abs(out - ref)))
    assert max_err < 0.2, f"max abs err vs reference: {max_err}"

    print("KERNEL_OK")
</pallas_src>

<mosaic_0001>
module attributes {stable_mosaic.version = 11 : i64} {
  func.func @kernel(%arg0: i32, %arg1: i32, %arg2: memref<8x4x256xf32, #tpu.memory_space<vmem>>, %arg3: memref<4x512xbf16, #tpu.memory_space<vmem>>, %arg4: memref<4x512xbf16, #tpu.memory_space<vmem>>, %arg5: memref<1x512xf32, #tpu.memory_space<vmem>>, %arg6: memref<512x128xbf16, #tpu.memory_space<vmem>>, %arg7: memref<1x128xf32, #tpu.memory_space<vmem>>, %arg8: memref<8x128xf32, #tpu.memory_space<vmem>>, %arg9: memref<8x4x128xf32, #tpu.memory_space<vmem>>, %arg10: memref<8x4x128xf32, #tpu.memory_space<vmem>>) attributes {dimension_semantics = [#tpu.dimension_semantics<parallel>, #tpu.dimension_semantics<arbitrary>], iteration_bounds = array<i64: 1, 1>, scalar_prefetch = 0 : i64, scratch_operands = 2 : i64, tpu.core_type = #tpu.core_type<tc>, window_params = [{transform_indices = @transform_0, window_bounds = array<i64: 8, 4, 256>}, {pipeline_mode = #tpu.pipeline_mode<synchronous>, transform_indices = @transform_1, window_bounds = array<i64: 4, 512>}, {pipeline_mode = #tpu.pipeline_mode<synchronous>, transform_indices = @transform_2, window_bounds = array<i64: 4, 512>}, {pipeline_mode = #tpu.pipeline_mode<synchronous>, transform_indices = @transform_3, window_bounds = array<i64: 1, 512>}, {pipeline_mode = #tpu.pipeline_mode<synchronous>, transform_indices = @transform_4, window_bounds = array<i64: 512, 128>}, {pipeline_mode = #tpu.pipeline_mode<synchronous>, transform_indices = @transform_5, window_bounds = array<i64: 1, 128>}, {transform_indices = @transform_6, window_bounds = array<i64: 8, 128>}]} {
    %c0_i32 = arith.constant 0 : i32
    %0 = arith.cmpi eq, %arg1, %c0_i32 : i32
    %1 = arith.extui %0 : i1 to i32
    %c0_i32_0 = arith.constant 0 : i32
    %2 = arith.cmpi ne, %1, %c0_i32_0 : i32
    scf.if %2 {
      %cst = arith.constant -3.40282347E+38 : f32
      %20 = vector.broadcast %cst : f32 to vector<8x4x128xf32>
      %c0_31 = arith.constant 0 : index
      %c0_32 = arith.constant 0 : index
      %c0_33 = arith.constant 0 : index
      %21 = vector.load %arg9[%c0_31, %c0_32, %c0_33] : memref<8x4x128xf32, #tpu.memory_space<vmem>>, vector<8x4x128xf32>
      tpu.vector_store %arg9[%c0_31, %c0_32, %c0_33], %20 {strides = array<i32>} : memref<8x4x128xf32, #tpu.memory_space<vmem>>, vector<8x4x128xf32>,
      %cst_34 = arith.constant 0.000000e+00 : f32
      %22 = vector.broadcast %cst_34 : f32 to vector<8x4x128xf32>
      %c0_35 = arith.constant 0 : index
      %c0_36 = arith.constant 0 : index
      %c0_37 = arith.constant 0 : index
      %23 = vector.load %arg10[%c0_35, %c0_36, %c0_37] : memref<8x4x128xf32, #tpu.memory_space<vmem>>, vector<8x4x128xf32>
      tpu.vector_store %arg10[%c0_35, %c0_36, %c0_37], %22 {strides = array<i32>} : memref<8x4x128xf32, #tpu.memory_space<vmem>>, vector<8x4x128xf32>,
    } else {
    }
    %c0 = arith.constant 0 : index
    %c0_1 = arith.constant 0 : index
    %c0_2 = arith.constant 0 : index
    %3 = vector.load %arg2[%c0, %c0_1, %c0_2] : memref<8x4x256xf32, #tpu.memory_space<vmem>>, vector<8x4x128xf32>
    %c0_3 = arith.constant 0 : index
    %c0_4 = arith.constant 0 : index
    %c0_5 = arith.constant 0 : index
    %4 = vector.load %arg9[%c0_3, %c0_4, %c0_5] : memref<8x4x128xf32, #tpu.memory_space<vmem>>, vector<8x4x128xf32>
    %5 = arith.maximumf %4, %3 : vector<8x4x128xf32>
    %c0_6 = arith.constant 0 : index
    %c0_7 = arith.constant 0 : index
    %c0_8 = arith.constant 0 : index
    %6 = vector.load %arg9[%c0_6, %c0_7, %c0_8] : memref<8x4x128xf32, #tpu.memory_space<vmem>>, vector<8x4x128xf32>
    tpu.vector_store %arg9[%c0_6, %c0_7, %c0_8], %5 {strides = array<i32>} : memref<8x4x128xf32, #tpu.memory_space<vmem>>, vector<8x4x128xf32>,
    %c0_9 = arith.constant 0 : index
    %c0_10 = arith.constant 0 : index
    %c0_11 = arith.constant 0 : index
    %7 = vector.load %arg10[%c0_9, %c0_10, %c0_11] : memref<8x4x128xf32, #tpu.memory_space<vmem>>, vector<8x4x128xf32>
    %8 = arith.addf %7, %3 : vector<8x4x128xf32>
    %c0_12 = arith.constant 0 : index
    %c0_13 = arith.constant 0 : index
    %c0_14 = arith.constant 0 : index
    %9 = vector.load %arg10[%c0_12, %c0_13, %c0_14] : memref<8x4x128xf32, #tpu.memory_space<vmem>>, vector<8x4x128xf32>
    tpu.vector_store %arg10[%c0_12, %c0_13, %c0_14], %8 {strides = array<i32>} : memref<8x4x128xf32, #tpu.memory_space<vmem>>, vector<8x4x128xf32>,
    %c0_15 = arith.constant 0 : index
    %c0_16 = arith.constant 0 : index
    %c128 = arith.constant 128 : index
    %10 = vector.load %arg2[%c0_15, %c0_16, %c128] : memref<8x4x256xf32, #tpu.memory_space<vmem>>, vector<8x4x128xf32>
    %c0_17 = arith.constant 0 : index
    %c0_18 = arith.constant 0 : index
    %c0_19 = arith.constant 0 : index
    %11 = vector.load %arg9[%c0_17, %c0_18, %c0_19] : memref<8x4x128xf32, #tpu.memory_space<vmem>>, vector<8x4x128xf32>
    %12 = arith.maximumf %11, %10 : vector<8x4x128xf32>
    %c0_20 = arith.constant 0 : index
    %c0_21 = arith.constant 0 : index
    %c0_22 = arith.constant 0 : index
    %13 = vector.load %arg9[%c0_20, %c0_21, %c0_22] : memref<8x4x128xf32, #tpu.memory_space<vmem>>, vector<8x4x128xf32>
    tpu.vector_store %arg9[%c0_20, %c0_21, %c0_22], %12 {strides = array<i32>} : memref<8x4x128xf32, #tpu.memory_space<vmem>>, vector<8x4x128xf32>,
    %c0_23 = arith.constant 0 : index
    %c0_24 = arith.constant 0 : index
    %c0_25 = arith.constant 0 : index
    %14 = vector.load %arg10[%c0_23, %c0_24, %c0_25] : memref<8x4x128xf32, #tpu.memory_space<vmem>>, vector<8x4x128xf32>
    %15 = arith.addf %14, %10 : vector<8x4x128xf32>
    %c0_26 = arith.constant 0 : index
    %c0_27 = arith.constant 0 : index
    %c0_28 = arith.constant 0 : index
    %16 = vector.load %arg10[%c0_26, %c0_27, %c0_28] : memref<8x4x128xf32, #tpu.memory_space<vmem>>, vector<8x4x128xf32>
    tpu.vector_store %arg10[%c0_26, %c0_27, %c0_28], %15 {strides = array<i32>} : memref<8x4x128xf32, #tpu.memory_space<vmem>>, vector<8x4x128xf32>,
    %c0_i32_29 = arith.constant 0 : i32
    %17 = arith.cmpi eq, %arg1, %c0_i32_29 : i32
    %18 = arith.extui %17 : i1 to i32
    %c0_i32_30 = arith.constant 0 : i32
    %19 = arith.cmpi ne, %18, %c0_i32_30 : i32
    scf.if %19 {
      %c0_31 = arith.constant 0 : index
      %c0_32 = arith.constant 0 : index
      %c0_33 = arith.constant 0 : index
      %20 = vector.load %arg9[%c0_31, %c0_32, %c0_33] : memref<8x4x128xf32, #tpu.memory_space<vmem>>, vector<8x4x128xf32>
      %cst = arith.constant dense<0xFF800000> : vector<8x4xf32>
      %21 = vector.multi_reduction <maximumf>, %20, %cst [2] : vector<8x4x128xf32> to vector<8x4xf32>
      %cst_34 = arith.constant 2.000000e+01 : f32
      %22 = vector.broadcast %cst_34 : f32 to vector<8x4xf32>
      %23 = arith.minimumf %21, %22 : vector<8x4xf32>
      %24 = math.exp %23 : vector<8x4xf32>
      %cst_35 = arith.constant 2.000000e+00 : f32
      %25 = vector.broadcast %cst_35 : f32 to vector<8x4xf32>
      %26 = arith.addf %24, %25 : vector<8x4xf32>
      %27 = arith.mulf %24, %26 : vector<8x4xf32>
      %cst_36 = arith.constant 2.000000e+00 : f32
      %28 = vector.broadcast %cst_36 : f32 to vector<8x4xf32>
      %29 = arith.addf %27, %28 : vector<8x4xf32>
      %30 = tpu.reciprocal %29 {approx = true} : vector<8x4xf32> -> vector<8x4xf32>
      %31 = arith.mulf %27, %30 : vector<8x4xf32>
      %cst_37 = arith.constant 2.000000e+01 : f32
      %32 = vector.broadcast %cst_37 : f32 to vector<8x4xf32>
      %33 = arith.cmpf ogt, %21, %32 : vector<8x4xf32>
      %cst_38 = arith.constant 1.000000e+00 : f32
      %34 = vector.broadcast %cst_38 : f32 to vector<8x4xf32>
      %35 = arith.select %33, %34, %31 : vector<8x4xi1>, vector<8x4xf32>
      %36 = arith.mulf %21, %35 : vector<8x4xf32>
      %c0_39 = arith.constant 0 : index
      %c0_40 = arith.constant 0 : index
      %c0_41 = arith.constant 0 : index
      %37 = vector.load %arg10[%c0_39, %c0_40, %c0_41] : memref<8x4x128xf32, #tpu.memory_space<vmem>>, vector<8x4x128xf32>
      %cst_42 = arith.constant dense<0.000000e+00> : vector<8x4xf32>
      %38 = vector.multi_reduction <add>, %37, %cst_42 [2] : vector<8x4x128xf32> to vector<8x4xf32>
      %cst_43 = arith.constant 3.906250e-03 : f32
      %39 = vector.broadcast %cst_43 : f32 to vector<8x4xf32>
      %40 = arith.mulf %38, %39 : vector<8x4xf32>
      %cst_44 = arith.constant 2.000000e+01 : f32
      %41 = vector.broadcast %cst_44 : f32 to vector<8x4xf32>
      %42 = arith.minimumf %40, %41 : vector<8x4xf32>
      %43 = math.exp %42 : vector<8x4xf32>
      %cst_45 = arith.constant 2.000000e+00 : f32
      %44 = vector.broadcast %cst_45 : f32 to vector<8x4xf32>
      %45 = arith.addf %43, %44 : vector<8x4xf32>
      %46 = arith.mulf %43, %45 : vector<8x4xf32>
      %cst_46 = arith.constant 2.000000e+00 : f32
      %47 = vector.broadcast %cst_46 : f32 to vector<8x4xf32>
      %48 = arith.addf %46, %47 : vector<8x4xf32>
      %49 = tpu.reciprocal %48 {approx = true} : vector<8x4xf32> -> vector<8x4xf32>
      %50 = arith.mulf %46, %49 : vector<8x4xf32>
      %cst_47 = arith.constant 2.000000e+01 : f32
      %51 = vector.broadcast %cst_47 : f32 to vector<8x4xf32>
      %52 = arith.cmpf ogt, %40, %51 : vector<8x4xf32>
      %cst_48 = arith.constant 1.000000e+00 : f32
      %53 = vector.broadcast %cst_48 : f32 to vector<8x4xf32>
      %54 = arith.select %52, %53, %50 : vector<8x4xi1>, vector<8x4xf32>
      %55 = arith.mulf %40, %54 : vector<8x4xf32>
      %56 = arith.truncf %36 : vector<8x4xf32> to vector<8x4xbf16>
      %c0_49 = arith.constant 0 : index
      %c0_50 = arith.constant 0 : index
      %57 = vector.load %arg3[%c0_49, %c0_50] : memref<4x512xbf16, #tpu.memory_space<vmem>>, vector<4x512xbf16>
      %cst_51 = arith.constant dense<0.000000e+00> : vector<8x512xf32>
      %58 = tpu.matmul %56, %57, %cst_51 {dimension_numbers = #tpu.dot_dimension_numbers<[1], [0], [0], [1], [0, 0, 1, 1], [], []>} : vector<8x4xbf16>, vector<4x512xbf16>, vector<8x512xf32> -> vector<8x512xf32>
      %59 = arith.truncf %55 : vector<8x4xf32> to vector<8x4xbf16>
      %c0_52 = arith.constant 0 : index
      %c0_53 = arith.constant 0 : index
      %60 = vector.load %arg4[%c0_52, %c0_53] : memref<4x512xbf16, #tpu.memory_space<vmem>>, vector<4x512xbf16>
      %cst_54 = arith.constant dense<0.000000e+00> : vector<8x512xf32>
      %61 = tpu.matmul %59, %60, %cst_54 {dimension_numbers = #tpu.dot_dimension_numbers<[1], [0], [0], [1], [0, 0, 1, 1], [], []>} : vector<8x4xbf16>, vector<4x512xbf16>, vector<8x512xf32> -> vector<8x512xf32>
      %62 = arith.addf %58, %61 : vector<8x512xf32>
      %c0_55 = arith.constant 0 : index
      %c0_56 = arith.constant 0 : index
      %63 = vector.load %arg5[%c0_55, %c0_56] : memref<1x512xf32, #tpu.memory_space<vmem>>, vector<1x512xf32>
      %64 = vector.broadcast %63 : vector<1x512xf32> to vector<8x512xf32>
      %65 = arith.addf %62, %64 : vector<8x512xf32>
      %cst_57 = arith.constant 2.000000e+01 : f32
      %66 = vector.broadcast %cst_57 : f32 to vector<8x512xf32>
      %67 = arith.minimumf %65, %66 : vector<8x512xf32>
      %68 = math.exp %67 : vector<8x512xf32>
      %cst_58 = arith.constant 2.000000e+00 : f32
      %69 = vector.broadcast %cst_58 : f32 to vector<8x512xf32>
      %70 = arith.addf %68, %69 : vector<8x512xf32>
      %71 = arith.mulf %68, %70 : vector<8x512xf32>
      %cst_59 = arith.constant 2.000000e+00 : f32
      %72 = vector.broadcast %cst_59 : f32 to vector<8x512xf32>
      %73 = arith.addf %71, %72 : vector<8x512xf32>
      %74 = tpu.reciprocal %73 {approx = true} : vector<8x512xf32> -> vector<8x512xf32>
      %75 = arith.mulf %71, %74 : vector<8x512xf32>
      %cst_60 = arith.constant 2.000000e+01 : f32
      %76 = vector.broadcast %cst_60 : f32 to vector<8x512xf32>
      %77 = arith.cmpf ogt, %65, %76 : vector<8x512xf32>
      %cst_61 = arith.constant 1.000000e+00 : f32
      %78 = vector.broadcast %cst_61 : f32 to vector<8x512xf32>
      %79 = arith.select %77, %78, %75 : vector<8x512xi1>, vector<8x512xf32>
      %80 = arith.mulf %65, %79 : vector<8x512xf32>
      %81 = arith.truncf %80 : vector<8x512xf32> to vector<8x512xbf16>
      %c0_62 = arith.constant 0 : index
      %c0_63 = arith.constant 0 : index
      %82 = vector.load %arg6[%c0_62, %c0_63] : memref<512x128xbf16, #tpu.memory_space<vmem>>, vector<512x128xbf16>
      %cst_64 = arith.constant dense<0.000000e+00> : vector<8x128xf32>
      %83 = tpu.matmul %81, %82, %cst_64 {dimension_numbers = #tpu.dot_dimension_numbers<[1], [0], [0], [1], [0, 0, 1, 1], [], []>} : vector<8x512xbf16>, vector<512x128xbf16>, vector<8x128xf32> -> vector<8x128xf32>
      %c0_65 = arith.constant 0 : index
      %c0_66 = arith.constant 0 : index
      %84 = vector.load %arg7[%c0_65, %c0_66] : memref<1x128xf32, #tpu.memory_space<vmem>>, vector<1x128xf32>
      %85 = vector.broadcast %84 : vector<1x128xf32> to vector<8x128xf32>
      %86 = arith.addf %83, %85 : vector<8x128xf32>
      %c0_67 = arith.constant 0 : index
      %c0_68 = arith.constant 0 : index
      %87 = vector.load %arg8[%c0_67, %c0_68] : memref<8x128xf32, #tpu.memory_space<vmem>>, vector<8x128xf32>
      tpu.vector_store %arg8[%c0_67, %c0_68], %86 {strides = array<i32>} : memref<8x128xf32, #tpu.memory_space<vmem>>, vector<8x128xf32>,
    } else {
    }
    return
  }
  func.func @transform_0(%arg0: i32, %arg1: i32) -> (i32, i32, i32) {
    %c0_i32 = arith.constant 0 : i32
    %c0_i32_0 = arith.constant 0 : i32
    return %arg0, %c0_i32, %arg1 : i32, i32, i32
  }
  func.func @transform_1(%arg0: i32, %arg1: i32) -> (i32, i32) {
    %c0_i32 = arith.constant 0 : i32
    %c0_i32_0 = arith.constant 0 : i32
    %c0_i32_1 = arith.constant 0 : i32
    return %c0_i32, %c0_i32_0 : i32, i32
  }
  func.func @transform_2(%arg0: i32, %arg1: i32) -> (i32, i32) {
    %c0_i32 = arith.constant 0 : i32
    %c0_i32_0 = arith.constant 0 : i32
    %c0_i32_1 = arith.constant 0 : i32
    return %c0_i32, %c0_i32_0 : i32, i32
  }
  func.func @transform_3(%arg0: i32, %arg1: i32) -> (i32, i32) {
    %c0_i32 = arith.constant 0 : i32
    %c0_i32_0 = arith.constant 0 : i32
    %c0_i32_1 = arith.constant 0 : i32
    return %c0_i32, %c0_i32_0 : i32, i32
  }
  func.func @transform_4(%arg0: i32, %arg1: i32) -> (i32, i32) {
    %c0_i32 = arith.constant 0 : i32
    %c0_i32_0 = arith.constant 0 : i32
    %c0_i32_1 = arith.constant 0 : i32
    return %c0_i32, %c0_i32_0 : i32, i32
  }
  func.func @transform_5(%arg0: i32, %arg1: i32) -> (i32, i32) {
    %c0_i32 = arith.constant 0 : i32
    %c0_i32_0 = arith.constant 0 : i32
    %c0_i32_1 = arith.constant 0 : i32
    return %c0_i32, %c0_i32_0 : i32, i32
  }
  func.func @transform_6(%arg0: i32, %arg1: i32) -> (i32, i32) {
    %c0_i32 = arith.constant 0 : i32
    %c0_i32_0 = arith.constant 0 : i32
    return %arg0, %c0_i32 : i32, i32
  }
}

module attributes {stable_mosaic.version = 11 : i64} {
  func.func @kernel(%arg0: i32, %arg1: i32, %arg2: memref<8x4x256xf32, #tpu.memory_space<vmem>>, %arg3: memref<4x512xbf16, #tpu.memory_space<vmem>>, %arg4: memref<4x512xbf16, #tpu.memory_space<vmem>>, %arg5: memref<1x512xf32, #tpu.memory_space<vmem>>, %arg6: memref<512x128xbf16, #tpu.memory_space<vmem>>, %arg7: memref<1x128xf32, #tpu.memory_space<vmem>>, %arg8: memref<8x128xf32, #tpu.memory_space<vmem>>, %arg9: memref<8x4x128xf32, #tpu.memory_space<vmem>>, %arg10: memref<8x4x128xf32, #tpu.memory_space<vmem>>) attributes {dimension_semantics = [#tpu.dimension_semantics<parallel>, #tpu.dimension_semantics<arbitrary>], iteration_bounds = array<i64: 1, 1>, scalar_prefetch = 0 : i64, scratch_operands = 2 : i64, tpu.core_type = #tpu.core_type<tc>, window_params = [{transform_indices = @transform_0, window_bounds = array<i64: 8, 4, 256>}, {pipeline_mode = #tpu.pipeline_mode<synchronous>, transform_indices = @transform_1, window_bounds = array<i64: 4, 512>}, {pipeline_mode = #tpu.pipeline_mode<synchronous>, transform_indices = @transform_2, window_bounds = array<i64: 4, 512>}, {pipeline_mode = #tpu.pipeline_mode<synchronous>, transform_indices = @transform_3, window_bounds = array<i64: 1, 512>}, {pipeline_mode = #tpu.pipeline_mode<synchronous>, transform_indices = @transform_4, window_bounds = array<i64: 512, 128>}, {pipeline_mode = #tpu.pipeline_mode<synchronous>, transform_indices = @transform_5, window_bounds = array<i64: 1, 128>}, {transform_indices = @transform_6, window_bounds = array<i64: 8, 128>}]} {
    %c0_i32 = arith.constant 0 : i32
    %0 = arith.cmpi eq, %arg1, %c0_i32 : i32
    %1 = arith.extui %0 : i1 to i32
    %c0_i32_0 = arith.constant 0 : i32
    %2 = arith.cmpi ne, %1, %c0_i32_0 : i32
    scf.if %2 {
      %cst = arith.constant -3.40282347E+38 : f32
      %20 = vector.broadcast %cst : f32 to vector<8x4x128xf32>
      %c0_31 = arith.constant 0 : index
      %c0_32 = arith.constant 0 : index
      %c0_33 = arith.constant 0 : index
      %21 = vector.load %arg9[%c0_31, %c0_32, %c0_33] : memref<8x4x128xf32, #tpu.memory_space<vmem>>, vector<8x4x128xf32>
      tpu.vector_store %arg9[%c0_31, %c0_32, %c0_33], %20 {strides = array<i32>} : memref<8x4x128xf32, #tpu.memory_space<vmem>>, vector<8x4x128xf32>,
      %cst_34 = arith.constant 0.000000e+00 : f32
      %22 = vector.broadcast %cst_34 : f32 to vector<8x4x128xf32>
      %c0_35 = arith.constant 0 : index
      %c0_36 = arith.constant 0 : index
      %c0_37 = arith.constant 0 : index
      %23 = vector.load %arg10[%c0_35, %c0_36, %c0_37] : memref<8x4x128xf32, #tpu.memory_space<vmem>>, vector<8x4x128xf32>
      tpu.vector_store %arg10[%c0_35, %c0_36, %c0_37], %22 {strides = array<i32>} : memref<8x4x128xf32, #tpu.memory_space<vmem>>, vector<8x4x128xf32>,
    } else {
    }
    %c0 = arith.constant 0 : index
    %c0_1 = arith.constant 0 : index
    %c0_2 = arith.constant 0 : index
    %3 = vector.load %arg2[%c0, %c0_1, %c0_2] : memref<8x4x256xf32, #tpu.memory_space<vmem>>, vector<8x4x128xf32>
    %c0_3 = arith.constant 0 : index
    %c0_4 = arith.constant 0 : index
    %c0_5 = arith.constant 0 : index
    %4 = vector.load %arg9[%c0_3, %c0_4, %c0_5] : memref<8x4x128xf32, #tpu.memory_space<vmem>>, vector<8x4x128xf32>
    %5 = arith.maximumf %4, %3 : vector<8x4x128xf32>
    %c0_6 = arith.constant 0 : index
    %c0_7 = arith.constant 0 : index
    %c0_8 = arith.constant 0 : index
    %6 = vector.load %arg9[%c0_6, %c0_7, %c0_8] : memref<8x4x128xf32, #tpu.memory_space<vmem>>, vector<8x4x128xf32>
    tpu.vector_store %arg9[%c0_6, %c0_7, %c0_8], %5 {strides = array<i32>} : memref<8x4x128xf32, #tpu.memory_space<vmem>>, vector<8x4x128xf32>,
    %c0_9 = arith.constant 0 : index
    %c0_10 = arith.constant 0 : index
    %c0_11 = arith.constant 0 : index
    %7 = vector.load %arg10[%c0_9, %c0_10, %c0_11] : memref<8x4x128xf32, #tpu.memory_space<vmem>>, vector<8x4x128xf32>
    %8 = arith.addf %7, %3 : vector<8x4x128xf32>
    %c0_12 = arith.constant 0 : index
    %c0_13 = arith.constant 0 : index
    %c0_14 = arith.constant 0 : index
    %9 = vector.load %arg10[%c0_12, %c0_13, %c0_14] : memref<8x4x128xf32, #tpu.memory_space<vmem>>, vector<8x4x128xf32>
    tpu.vector_store %arg10[%c0_12, %c0_13, %c0_14], %8 {strides = array<i32>} : memref<8x4x128xf32, #tpu.memory_space<vmem>>, vector<8x4x128xf32>,
    %c0_15 = arith.constant 0 : index
    %c0_16 = arith.constant 0 : index
    %c128 = arith.constant 128 : index
    %10 = vector.load %arg2[%c0_15, %c0_16, %c128] : memref<8x4x256xf32, #tpu.memory_space<vmem>>, vector<8x4x128xf32>
    %c0_17 = arith.constant 0 : index
    %c0_18 = arith.constant 0 : index
    %c0_19 = arith.constant 0 : index
    %11 = vector.load %arg9[%c0_17, %c0_18, %c0_19] : memref<8x4x128xf32, #tpu.memory_space<vmem>>, vector<8x4x128xf32>
    %12 = arith.maximumf %11, %10 : vector<8x4x128xf32>
    %c0_20 = arith.constant 0 : index
    %c0_21 = arith.constant 0 : index
    %c0_22 = arith.constant 0 : index
    %13 = vector.load %arg9[%c0_20, %c0_21, %c0_22] : memref<8x4x128xf32, #tpu.memory_space<vmem>>, vector<8x4x128xf32>
    tpu.vector_store %arg9[%c0_20, %c0_21, %c0_22], %12 {strides = array<i32>} : memref<8x4x128xf32, #tpu.memory_space<vmem>>, vector<8x4x128xf32>,
    %c0_23 = arith.constant 0 : index
    %c0_24 = arith.constant 0 : index
    %c0_25 = arith.constant 0 : index
    %14 = vector.load %arg10[%c0_23, %c0_24, %c0_25] : memref<8x4x128xf32, #tpu.memory_space<vmem>>, vector<8x4x128xf32>
    %15 = arith.addf %14, %10 : vector<8x4x128xf32>
    %c0_26 = arith.constant 0 : index
    %c0_27 = arith.constant 0 : index
    %c0_28 = arith.constant 0 : index
    %16 = vector.load %arg10[%c0_26, %c0_27, %c0_28] : memref<8x4x128xf32, #tpu.memory_space<vmem>>, vector<8x4x128xf32>
    tpu.vector_store %arg10[%c0_26, %c0_27, %c0_28], %15 {strides = array<i32>} : memref<8x4x128xf32, #tpu.memory_space<vmem>>, vector<8x4x128xf32>,
    %c0_i32_29 = arith.constant 0 : i32
    %17 = arith.cmpi eq, %arg1, %c0_i32_29 : i32
    %18 = arith.extui %17 : i1 to i32
    %c0_i32_30 = arith.constant 0 : i32
    %19 = arith.cmpi ne, %18, %c0_i32_30 : i32
    scf.if %19 {
      %c0_31 = arith.constant 0 : index
      %c0_32 = arith.constant 0 : index
      %c0_33 = arith.constant 0 : index
      %20 = vector.load %arg9[%c0_31, %c0_32, %c0_33] : memref<8x4x128xf32, #tpu.memory_space<vmem>>, vector<8x4x128xf32>
      %cst = arith.constant dense<0xFF800000> : vector<8x4xf32>
      %21 = vector.multi_reduction <maximumf>, %20, %cst [2] : vector<8x4x128xf32> to vector<8x4xf32>
      %cst_34 = arith.constant 2.000000e+01 : f32
      %22 = vector.broadcast %cst_34 : f32 to vector<8x4xf32>
      %23 = arith.minimumf %21, %22 : vector<8x4xf32>
      %24 = math.exp %23 : vector<8x4xf32>
      %cst_35 = arith.constant 2.000000e+00 : f32
      %25 = vector.broadcast %cst_35 : f32 to vector<8x4xf32>
      %26 = arith.addf %24, %25 : vector<8x4xf32>
      %27 = arith.mulf %24, %26 : vector<8x4xf32>
      %cst_36 = arith.constant 2.000000e+00 : f32
      %28 = vector.broadcast %cst_36 : f32 to vector<8x4xf32>
      %29 = arith.addf %27, %28 : vector<8x4xf32>
      %30 = tpu.reciprocal %29 {approx = true} : vector<8x4xf32> -> vector<8x4xf32>
      %31 = arith.mulf %27, %30 : vector<8x4xf32>
      %cst_37 = arith.constant 2.000000e+01 : f32
      %32 = vector.broadcast %cst_37 : f32 to vector<8x4xf32>
      %33 = arith.cmpf ogt, %21, %32 : vector<8x4xf32>
      %cst_38 = arith.constant 1.000000e+00 : f32
      %34 = vector.broadcast %cst_38 : f32 to vector<8x4xf32>
      %35 = arith.select %33, %34, %31 : vector<8x4xi1>, vector<8x4xf32>
      %36 = arith.mulf %21, %35 : vector<8x4xf32>
      %c0_39 = arith.constant 0 : index
      %c0_40 = arith.constant 0 : index
      %c0_41 = arith.constant 0 : index
      %37 = vector.load %arg10[%c0_39, %c0_40, %c0_41] : memref<8x4x128xf32, #tpu.memory_space<vmem>>, vector<8x4x128xf32>
      %cst_42 = arith.constant dense<0.000000e+00> : vector<8x4xf32>
      %38 = vector.multi_reduction <add>, %37, %cst_42 [2] : vector<8x4x128xf32> to vector<8x4xf32>
      %cst_43 = arith.constant 3.906250e-03 : f32
      %39 = vector.broadcast %cst_43 : f32 to vector<8x4xf32>
      %40 = arith.mulf %38, %39 : vector<8x4xf32>
      %cst_44 = arith.constant 2.000000e+01 : f32
      %41 = vector.broadcast %cst_44 : f32 to vector<8x4xf32>
      %42 = arith.minimumf %40, %41 : vector<8x4xf32>
      %43 = math.exp %42 : vector<8x4xf32>
      %cst_45 = arith.constant 2.000000e+00 : f32
      %44 = vector.broadcast %cst_45 : f32 to vector<8x4xf32>
      %45 = arith.addf %43, %44 : vector<8x4xf32>
      %46 = arith.mulf %43, %45 : vector<8x4xf32>
      %cst_46 = arith.constant 2.000000e+00 : f32
      %47 = vector.broadcast %cst_46 : f32 to vector<8x4xf32>
      %48 = arith.addf %46, %47 : vector<8x4xf32>
      %49 = tpu.reciprocal %48 {approx = true} : vector<8x4xf32> -> vector<8x4xf32>
      %50 = arith.mulf %46, %49 : vector<8x4xf32>
      %cst_47 = arith.constant 2.000000e+01 : f32
      %51 = vector.broadcast %cst_47 : f32 to vector<8x4xf32>
      %52 = arith.cmpf ogt, %40, %51 : vector<8x4xf32>
      %cst_48 = arith.constant 1.000000e+00 : f32
      %53 = vector.broadcast %cst_48 : f32 to vector<8x4xf32>
      %54 = arith.select %52, %53, %50 : vector<8x4xi1>, vector<8x4xf32>
      %55 = arith.mulf %40, %54 : vector<8x4xf32>
      %56 = arith.truncf %36 : vector<8x4xf32> to vector<8x4xbf16>
      %c0_49 = arith.constant 0 : index
      %c0_50 = arith.constant 0 : index
      %57 = vector.load %arg3[%c0_49, %c0_50] : memref<4x512xbf16, #tpu.memory_space<vmem>>, vector<4x512xbf16>
      %cst_51 = arith.constant dense<0.000000e+00> : vector<8x512xf32>
      %58 = tpu.matmul %56, %57, %cst_51 {dimension_numbers = #tpu.dot_dimension_numbers<[1], [0], [0], [1], [0, 0, 1, 1], [], []>} : vector<8x4xbf16>, vector<4x512xbf16>, vector<8x512xf32> -> vector<8x512xf32>
      %59 = arith.truncf %55 : vector<8x4xf32> to vector<8x4xbf16>
      %c0_52 = arith.constant 0 : index
      %c0_53 = arith.constant 0 : index
      %60 = vector.load %arg4[%c0_52, %c0_53] : memref<4x512xbf16, #tpu.memory_space<vmem>>, vector<4x512xbf16>
      %cst_54 = arith.constant dense<0.000000e+00> : vector<8x512xf32>
      %61 = tpu.matmul %59, %60, %cst_54 {dimension_numbers = #tpu.dot_dimension_numbers<[1], [0], [0], [1], [0, 0, 1, 1], [], []>} : vector<8x4xbf16>, vector<4x512xbf16>, vector<8x512xf32> -> vector<8x512xf32>
      %62 = arith.addf %58, %61 : vector<8x512xf32>
      %c0_55 = arith.constant 0 : index
      %c0_56 = arith.constant 0 : index
      %63 = vector.load %arg5[%c0_55, %c0_56] : memref<1x512xf32, #tpu.memory_space<vmem>>, vector<1x512xf32>
      %64 = vector.broadcast %63 : vector<1x512xf32> to vector<8x512xf32>
      %65 = arith.addf %62, %64 : vector<8x512xf32>
      %cst_57 = arith.constant 2.000000e+01 : f32
      %66 = vector.broadcast %cst_57 : f32 to vector<8x512xf32>
      %67 = arith.minimumf %65, %66 : vector<8x512xf32>
      %68 = math.exp %67 : vector<8x512xf32>
      %cst_58 = arith.constant 2.000000e+00 : f32
      %69 = vector.broadcast %cst_58 : f32 to vector<8x512xf32>
      %70 = arith.addf %68, %69 : vector<8x512xf32>
      %71 = arith.mulf %68, %70 : vector<8x512xf32>
      %cst_59 = arith.constant 2.000000e+00 : f32
      %72 = vector.broadcast %cst_59 : f32 to vector<8x512xf32>
      %73 = arith.addf %71, %72 : vector<8x512xf32>
      %74 = tpu.reciprocal %73 {approx = true} : vector<8x512xf32> -> vector<8x512xf32>
      %75 = arith.mulf %71, %74 : vector<8x512xf32>
      %cst_60 = arith.constant 2.000000e+01 : f32
      %76 = vector.broadcast %cst_60 : f32 to vector<8x512xf32>
      %77 = arith.cmpf ogt, %65, %76 : vector<8x512xf32>
      %cst_61 = arith.constant 1.000000e+00 : f32
      %78 = vector.broadcast %cst_61 : f32 to vector<8x512xf32>
      %79 = arith.select %77, %78, %75 : vector<8x512xi1>, vector<8x512xf32>
      %80 = arith.mulf %65, %79 : vector<8x512xf32>
      %81 = arith.truncf %80 : vector<8x512xf32> to vector<8x512xbf16>
      %c0_62 = arith.constant 0 : index
      %c0_63 = arith.constant 0 : index
      %82 = vector.load %arg6[%c0_62, %c0_63] : memref<512x128xbf16, #tpu.memory_space<vmem>>, vector<512x128xbf16>
      %cst_64 = arith.constant dense<0.000000e+00> : vector<8x128xf32>
      %83 = tpu.matmul %81, %82, %cst_64 {dimension_numbers = #tpu.dot_dimension_numbers<[1], [0], [0], [1], [0, 0, 1, 1], [], []>} : vector<8x512xbf16>, vector<512x128xbf16>, vector<8x128xf32> -> vector<8x128xf32>
      %c0_65 = arith.constant 0 : index
      %c0_66 = arith.constant 0 : index
      %84 = vector.load %arg7[%c0_65, %c0_66] : memref<1x128xf32, #tpu.memory_space<vmem>>, vector<1x128xf32>
      %85 = vector.broadcast %84 : vector<1x128xf32> to vector<8x128xf32>
      %86 = arith.addf %83, %85 : vector<8x128xf32>
      %c0_67 = arith.constant 0 : index
      %c0_68 = arith.constant 0 : index
      %87 = vector.load %arg8[%c0_67, %c0_68] : memref<8x128xf32, #tpu.memory_space<vmem>>, vector<8x128xf32>
      tpu.vector_store %arg8[%c0_67, %c0_68], %86 {strides = array<i32>} : memref<8x128xf32, #tpu.memory_space<vmem>>, vector<8x128xf32>,
    } else {
    }
    return
  }
  func.func @transform_0(%arg0: i32, %arg1: i32) -> (i32, i32, i32) {
    %c0_i32 = arith.constant 0 : i32
    %c0_i32_0 = arith.constant 0 : i32
    return %arg0, %c0_i32, %arg1 : i32, i32, i32
  }
  func.func @transform_1(%arg0: i32, %arg1: i32) -> (i32, i32) {
    %c0_i32 = arith.constant 0 : i32
    %c0_i32_0 = arith.constant 0 : i32
    %c0_i32_1 = arith.constant 0 : i32
    return %c0_i32, %c0_i32_0 : i32, i32
  }
  func.func @transform_2(%arg0: i32, %arg1: i32) -> (i32, i32) {
    %c0_i32 = arith.constant 0 : i32
    %c0_i32_0 = arith.constant 0 : i32
    %c0_i32_1 = arith.constant 0 : i32
    return %c0_i32, %c0_i32_0 : i32, i32
  }
  func.func @transform_3(%arg0: i32, %arg1: i32) -> (i32, i32) {
    %c0_i32 = arith.constant 0 : i32
    %c0_i32_0 = arith.constant 0 : i32
    %c0_i32_1 = arith.constant 0 : i32
    return %c0_i32, %c0_i32_0 : i32, i32
  }
  func.func @transform_4(%arg0: i32, %arg1: i32) -> (i32, i32) {
    %c0_i32 = arith.constant 0 : i32
    %c0_i32_0 = arith.constant 0 : i32
    %c0_i32_1 = arith.constant 0 : i32
    return %c0_i32, %c0_i32_0 : i32, i32
  }
  func.func @transform_5(%arg0: i32, %arg1: i32) -> (i32, i32) {
    %c0_i32 = arith.constant 0 : i32
    %c0_i32_0 = arith.constant 0 : i32
    %c0_i32_1 = arith.constant 0 : i32
    return %c0_i32, %c0_i32_0 : i32, i32
  }
  func.func @transform_6(%arg0: i32, %arg1: i32) -> (i32, i32) {
    %c0_i32 = arith.constant 0 : i32
    %c0_i32_0 = arith.constant 0 : i32
    return %arg0, %c0_i32 : i32, i32
  }
}

</mosaic_0001>

<llo_original>
// kernel: tpu_custom_call.1
$region0: #{tpu_custom_call.1}
  #allocation0 [shape = 'u32[]', space=smem, size = 0x4, offset = 0x4, fixed_abs, tag = 'smem constant byte address 0x4 - core index']
  #allocation1 [shape = 'u32[144,128]{1,0:T(1,128)}', space=vmem, size = 0x12000, scoped, tag = 'internal scratch']
  #allocation2 [shape = 'f32[8,4,128]{2,1,0:T(4,128)}', space=vmem, size = 0x4000, scoped, tag = 'scratch operand']
  #allocation3 [shape = 'f32[8,4,128]{2,1,0:T(4,128)}', space=vmem, size = 0x4000, scoped, tag = 'scratch operand']
  %s0 = inlined_call_operand.hbm [shape: f32[8,4,256], index: 0, kind: input, shape index: {}]
  %s1 = inlined_call_operand.hbm [shape: bf16[4,512], index: 1, kind: input, shape index: {}]
  %s2 = inlined_call_operand.hbm [shape: bf16[4,512], index: 2, kind: input, shape index: {}]
  %s3 = inlined_call_operand.vmem [shape: f32[1,512], index: 3, kind: input, shape index: {}]
  %s4 = inlined_call_operand.hbm [shape: bf16[512,128], index: 4, kind: input, shape index: {}]
  %s5 = inlined_call_operand.vmem [shape: f32[1,128], index: 5, kind: input, shape index: {}]
  %s6 = inlined_call_operand.hbm [shape: f32[8,128], index: 6, kind: output, shape index: {}]
  %s7 = sld [smem:[#allocation0]]
  $region58: #{tpu_custom_call.1} parent=0
    _
  %s9 = ssub.s32 1, %s7
  %s10 = scalar_select 0, %s9, %s7
  $region1: #{tpu_custom_call.1} parent=0
    #allocation4 [shape = 'u8[32768]{0}', space=vmem, size = 0x8000, scoped, tag = 'input window, operand 0, single buffered']
    #allocation5 [shape = 's32[1]{0}', space=sflag, size = 0x4, scoped, tag = 'scoped memory for tpu_custom_call.1']
    #allocation6 [shape = 's32[1]{0}', space=sflag, size = 0x4, scoped, tag = 'scoped memory for tpu_custom_call.1']
    #allocation7 [shape = 'u8[4096]{0}', space=vmem, size = 0x1000, scoped, tag = 'input window, operand 1, single buffered']
    #allocation8 [shape = 's32[1]{0}', space=sflag, size = 0x4, scoped, tag = 'scoped memory for tpu_custom_call.1']
    #allocation9 [shape = 'u8[4096]{0}', space=vmem, size = 0x1000, scoped, tag = 'input window, operand 2, single buffered']
    #allocation10 [shape = 'u8[131072]{0}', space=vmem, size = 0x20000, scoped, tag = 'input window, operand 4, single buffered']
    #allocation11 [shape = 's32[1]{0}', space=sflag, size = 0x4, scoped, tag = 'scoped memory for tpu_custom_call.1']
    #allocation12 [shape = 'u8[4096]{0}', space=vmem, size = 0x1000, scoped, tag = 'output window, operand 0, single buffered']
    %11 = vsyncpa [#allocation5], 0
    %12 = vsyncpa [#allocation8], 0
    %13 = vsyncpa [#allocation11], 0
    %14 = vsyncpa [#allocation6], 0
    // Predicated region
    $region2: #{tpu_custom_call.1} parent=1 // pred_check
      _
    $region3: #{tpu_custom_call.1} parent=1 // pred_check_branch
      %16 = sbr.rel (0) target = $region5
    $region4: #{tpu_custom_call.1} parent=1 // pred_region
      %s18 = ssub.s32 1024, 1024
      %19 = vsyncadd [#allocation5], %s18
      %s20 = sshll.u32 [#allocation4], 4
      %s21 = int_to_ptr.vmem [resolvable:$true] %s20
      %26 = dma.hbm_to_vmem [thread:$0]  %s0, 1024, %s21, [#allocation5], 128, 128, 8
    $region5: #{tpu_custom_call.1} parent=1 // pred_fallthru
      _
    // Predicated region
    $region6: #{tpu_custom_call.1} parent=1 // pred_check
      _
    $region7: #{tpu_custom_call.1} parent=1 // pred_check_branch
      %28 = sbr.rel (0) target = $region9
    $region8: #{tpu_custom_call.1} parent=1 // pred_region
      %s30 = ssub.s32 128, 128
      %31 = vsyncadd [#allocation8], %s30
      %s33 = sshll.u32 [#allocation7], 4
      %s34 = int_to_ptr.vmem [resolvable:$true] %s33
      %36 = dma.hbm_to_vmem [thread:$0]  %s1, 128, %s34, [#allocation8]
    $region9: #{tpu_custom_call.1} parent=1 // pred_fallthru
      _
    // Predicated region
    $region10: #{tpu_custom_call.1} parent=1 // pred_check
      _
    $region11: #{tpu_custom_call.1} parent=1 // pred_check_branch
      %38 = sbr.rel (0) target = $region13
    $region12: #{tpu_custom_call.1} parent=1 // pred_region
      %s40 = ssub.s32 128, 128
      %41 = vsyncadd [#allocation8], %s40
      %s43 = sshll.u32 [#allocation9], 4
      %s44 = int_to_ptr.vmem [resolvable:$true] %s43
      %46 = dma.hbm_to_vmem [thread:$0]  %s2, 128, %s44, [#allocation8]
    $region13: #{tpu_custom_call.1} parent=1 // pred_fallthru
      _
    // Predicated region
    $region14: #{tpu_custom_call.1} parent=1 // pred_check
      _
    $region15: #{tpu_custom_call.1} parent=1 // pred_check_branch
      %48 = sbr.rel (0) target = $region17
    $region16: #{tpu_custom_call.1} parent=1 // pred_region
      _
    $region17: #{tpu_custom_call.1} parent=1 // pred_fallthru
      _
    // Predicated region
    $region18: #{tpu_custom_call.1} parent=1 // pred_check
      _
    $region19: #{tpu_custom_call.1} parent=1 // pred_check_branch
      %50 = sbr.rel (0) target = $region21
    $region20: #{tpu_custom_call.1} parent=1 // pred_region
      %s52 = ssub.s32 4096, 4096
      %53 = vsyncadd [#allocation11], %s52
      %s54 = sshll.u32 [#allocation10], 4
      %s55 = int_to_ptr.vmem [resolvable:$true] %s54
      %60 = dma.hbm_to_vmem [thread:$0]  %s4, 4096, %s55, [#allocation11], 64, 64, 4
    $region21: #{tpu_custom_call.1} parent=1 // pred_fallthru
      _
    // Predicated region
    $region22: #{tpu_custom_call.1} parent=1 // pred_check
      _
    $region23: #{tpu_custom_call.1} parent=1 // pred_check_branch
      %62 = sbr.rel (0) target = $region25
    $region24: #{tpu_custom_call.1} parent=1 // pred_region
      _
    $region25: #{tpu_custom_call.1} parent=1 // pred_fallthru
      _
    // Predicated region
    $region26: #{tpu_custom_call.1} parent=1 // pred_check
      _
    $region27: #{tpu_custom_call.1} parent=1 // pred_check_branch
      %64 = sbr.rel (0) target = $region29
    $region28: #{tpu_custom_call.1} parent=1 // pred_region
      %65 = dma.done [#allocation5], 1024
    $region29: #{tpu_custom_call.1} parent=1 // pred_fallthru
      _
    // Predicated region
    $region30: #{tpu_custom_call.1} parent=1 // pred_check
      _
    $region31: #{tpu_custom_call.1} parent=1 // pred_check_branch
      %67 = sbr.rel (0) target = $region33
    $region32: #{tpu_custom_call.1} parent=1 // pred_region
      %68 = dma.done [#allocation8], 128
    $region33: #{tpu_custom_call.1} parent=1 // pred_fallthru
      _
    // Predicated region
    $region34: #{tpu_custom_call.1} parent=1 // pred_check
      _
    $region35: #{tpu_custom_call.1} parent=1 // pred_check_branch
      %70 = sbr.rel (0) target = $region37
    $region36: #{tpu_custom_call.1} parent=1 // pred_region
      %71 = dma.done [#allocation8], 128
    $region37: #{tpu_custom_call.1} parent=1 // pred_fallthru
      _
    // Predicated region
    $region38: #{tpu_custom_call.1} parent=1 // pred_check
      _
    $region39: #{tpu_custom_call.1} parent=1 // pred_check_branch
      %73 = sbr.rel (0) target = $region41
    $region40: #{tpu_custom_call.1} parent=1 // pred_region
      %74 = dma.done [#allocation11], 4096
    $region41: #{tpu_custom_call.1} parent=1 // pred_fallthru
      _
    %p76 = scmp.eq.s32.totalorder 0, 0
    // Predicated region
    $region42: #{tpu_custom_call.1} parent=1 // pred_check
      %p77 = pneg %p76
    $region43: #{tpu_custom_call.1} parent=1 // pred_check_branch
      %79 = sbr.rel (%p77) target = $region45
    $region44: #{tpu_custom_call.1} parent=1 // pred_region
      %80 = vst [vmem:[#allocation2] sm:$0xf] -3.4028235e+38
      %81 = vst [vmem:[#allocation2 + $0x4] sm:$0xf] -3.4028235e+38
      %82 = vst [vmem:[#allocation2 + $0x8] sm:$0xf] -3.4028235e+38
      %83 = vst [vmem:[#allocation2 + $0xc] sm:$0xf] -3.4028235e+38
      %84 = vst [vmem:[#allocation2 + $0x10] sm:$0xf] -3.4028235e+38
      %85 = vst [vmem:[#allocation2 + $0x14] sm:$0xf] -3.4028235e+38
      %86 = vst [vmem:[#allocation2 + $0x18] sm:$0xf] -3.4028235e+38
      %87 = vst [vmem:[#allocation2 + $0x1c] sm:$0xf] -3.4028235e+38
      %88 = vst [vmem:[#allocation3] sm:$0xf] 0.0
      %89 = vst [vmem:[#allocation3 + $0x4] sm:$0xf] 0.0
      %90 = vst [vmem:[#allocation3 + $0x8] sm:$0xf] 0.0
      %91 = vst [vmem:[#allocation3 + $0xc] sm:$0xf] 0.0
      %92 = vst [vmem:[#allocation3 + $0x10] sm:$0xf] 0.0
      %93 = vst [vmem:[#allocation3 + $0x14] sm:$0xf] 0.0
      %94 = vst [vmem:[#allocation3 + $0x18] sm:$0xf] 0.0
      %95 = vst [vmem:[#allocation3 + $0x1c] sm:$0xf] 0.0
    $region45: #{tpu_custom_call.1} parent=1 // pred_fallthru
      _
    %v96 = vld [vmem:[#allocation4] sm:$0xf]
    %v97 = vld [vmem:[#allocation4 + $0x8] sm:$0xf]
    %v98 = vld [vmem:[#allocation4 + $0x10] sm:$0xf]
    %v99 = vld [vmem:[#allocation4 + $0x18] sm:$0xf]
    %v100 = vld [vmem:[#allocation4 + $0x20] sm:$0xf]
    %v101 = vld [vmem:[#allocation4 + $0x28] sm:$0xf]
    %v102 = vld [vmem:[#allocation4 + $0x30] sm:$0xf]
    %v103 = vld [vmem:[#allocation4 + $0x38] sm:$0xf]
    %v104 = vld [vmem:[#allocation2] sm:$0xf]
    %v105 = vld [vmem:[#allocation2 + $0x4] sm:$0xf]
    %v106 = vld [vmem:[#allocation2 + $0x8] sm:$0xf]
    %v107 = vld [vmem:[#allocation2 + $0xc] sm:$0xf]
    %v108 = vld [vmem:[#allocation2 + $0x10] sm:$0xf]
    %v109 = vld [vmem:[#allocation2 + $0x14] sm:$0xf]
    %v110 = vld [vmem:[#allocation2 + $0x18] sm:$0xf]
    %v111 = vld [vmem:[#allocation2 + $0x1c] sm:$0xf]
    %v112 = vmax.f32 %v104, %v96
    %v113 = vmax.f32 %v105, %v97
    %v114 = vmax.f32 %v106, %v98
    %v115 = vmax.f32 %v107, %v99
    %v116 = vmax.f32 %v108, %v100
    %v117 = vmax.f32 %v109, %v101
    %v118 = vmax.f32 %v110, %v102
    %v119 = vmax.f32 %v111, %v103
    %120 = vst [vmem:[#allocation2] sm:$0xf] %v112
    %121 = vst [vmem:[#allocation2 + $0x4] sm:$0xf] %v113
    %122 = vst [vmem:[#allocation2 + $0x8] sm:$0xf] %v114
    %123 = vst [vmem:[#allocation2 + $0xc] sm:$0xf] %v115
    %124 = vst [vmem:[#allocation2 + $0x10] sm:$0xf] %v116
    %125 = vst [vmem:[#allocation2 + $0x14] sm:$0xf] %v117
    %126 = vst [vmem:[#allocation2 + $0x18] sm:$0xf] %v118
    %127 = vst [vmem:[#allocation2 + $0x1c] sm:$0xf] %v119
    %v128 = vld [vmem:[#allocation3] sm:$0xf]
    %v129 = vld [vmem:[#allocation3 + $0x4] sm:$0xf]
    %v130 = vld [vmem:[#allocation3 + $0x8] sm:$0xf]
    %v131 = vld [vmem:[#allocation3 + $0xc] sm:$0xf]
    %v132 = vld [vmem:[#allocation3 + $0x10] sm:$0xf]
    %v133 = vld [vmem:[#allocation3 + $0x14] sm:$0xf]
    %v134 = vld [vmem:[#allocation3 + $0x18] sm:$0xf]
    %v135 = vld [vmem:[#allocation3 + $0x1c] sm:$0xf]
    %v136 = vadd.f32 %v128, %v96
    %v137 = vadd.f32 %v129, %v97
    %v138 = vadd.f32 %v130, %v98
    %v139 = vadd.f32 %v131, %v99
    %v140 = vadd.f32 %v132, %v100
    %v141 = vadd.f32 %v133, %v101
    %v142 = vadd.f32 %v134, %v102
    %v143 = vadd.f32 %v135, %v103
    %144 = vst [vmem:[#allocation3] sm:$0xf] %v136
    %145 = vst [vmem:[#allocation3 + $0x4] sm:$0xf] %v137
    %146 = vst [vmem:[#allocation3 + $0x8] sm:$0xf] %v138
    %147 = vst [vmem:[#allocation3 + $0xc] sm:$0xf] %v139
    %148 = vst [vmem:[#allocation3 + $0x10] sm:$0xf] %v140
    %149 = vst [vmem:[#allocation3 + $0x14] sm:$0xf] %v141
    %150 = vst [vmem:[#allocation3 + $0x18] sm:$0xf] %v142
    %151 = vst [vmem:[#allocation3 + $0x1c] sm:$0xf] %v143
    %v152 = vld [vmem:[#allocation4 + $0x4] sm:$0xf]
    %v153 = vld [vmem:[#allocation4 + $0xc] sm:$0xf]
    %v154 = vld [vmem:[#allocation4 + $0x14] sm:$0xf]
    %v155 = vld [vmem:[#allocation4 + $0x1c] sm:$0xf]
    %v156 = vld [vmem:[#allocation4 + $0x24] sm:$0xf]
    %v157 = vld [vmem:[#allocation4 + $0x2c] sm:$0xf]
    %v158 = vld [vmem:[#allocation4 + $0x34] sm:$0xf]
    %v159 = vld [vmem:[#allocation4 + $0x3c] sm:$0xf]
    %v160 = vld [vmem:[#allocation2] sm:$0xf]
    %v161 = vld [vmem:[#allocation2 + $0x4] sm:$0xf]
    %v162 = vld [vmem:[#allocation2 + $0x8] sm:$0xf]
    %v163 = vld [vmem:[#allocation2 + $0xc] sm:$0xf]
    %v164 = vld [vmem:[#allocation2 + $0x10] sm:$0xf]
    %v165 = vld [vmem:[#allocation2 + $0x14] sm:$0xf]
    %v166 = vld [vmem:[#allocation2 + $0x18] sm:$0xf]
    %v167 = vld [vmem:[#allocation2 + $0x1c] sm:$0xf]
    %v168 = vmax.f32 %v160, %v152
    %v169 = vmax.f32 %v161, %v153
    %v170 = vmax.f32 %v162, %v154
    %v171 = vmax.f32 %v163, %v155
    %v172 = vmax.f32 %v164, %v156
    %v173 = vmax.f32 %v165, %v157
    %v174 = vmax.f32 %v166, %v158
    %v175 = vmax.f32 %v167, %v159
    %176 = vst [vmem:[#allocation2] sm:$0xf] %v168
    %177 = vst [vmem:[#allocation2 + $0x4] sm:$0xf] %v169
    %178 = vst [vmem:[#allocation2 + $0x8] sm:$0xf] %v170
    %179 = vst [vmem:[#allocation2 + $0xc] sm:$0xf] %v171
    %180 = vst [vmem:[#allocation2 + $0x10] sm:$0xf] %v172
    %181 = vst [vmem:[#allocation2 + $0x14] sm:$0xf] %v173
    %182 = vst [vmem:[#allocation2 + $0x18] sm:$0xf] %v174
    %183 = vst [vmem:[#allocation2 + $0x1c] sm:$0xf] %v175
    %v184 = vld [vmem:[#allocation3] sm:$0xf]
    %v185 = vld [vmem:[#allocation3 + $0x4] sm:$0xf]
    %v186 = vld [vmem:[#allocation3 + $0x8] sm:$0xf]
    %v187 = vld [vmem:[#allocation3 + $0xc] sm:$0xf]
    %v188 = vld [vmem:[#allocation3 + $0x10] sm:$0xf]
    %v189 = vld [vmem:[#allocation3 + $0x14] sm:$0xf]
    %v190 = vld [vmem:[#allocation3 + $0x18] sm:$0xf]
    %v191 = vld [vmem:[#allocation3 + $0x1c] sm:$0xf]
    %v192 = vadd.f32 %v184, %v152
    %v193 = vadd.f32 %v185, %v153
    %v194 = vadd.f32 %v186, %v154
    %v195 = vadd.f32 %v187, %v155
    %v196 = vadd.f32 %v188, %v156
    %v197 = vadd.f32 %v189, %v157
    %v198 = vadd.f32 %v190, %v158
    %v199 = vadd.f32 %v191, %v159
    %200 = vst [vmem:[#allocation3] sm:$0xf] %v192
    %201 = vst [vmem:[#allocation3 + $0x4] sm:$0xf] %v193
    %202 = vst [vmem:[#allocation3 + $0x8] sm:$0xf] %v194
    %203 = vst [vmem:[#allocation3 + $0xc] sm:$0xf] %v195
    %204 = vst [vmem:[#allocation3 + $0x10] sm:$0xf] %v196
    %205 = vst [vmem:[#allocation3 + $0x14] sm:$0xf] %v197
    %206 = vst [vmem:[#allocation3 + $0x18] sm:$0xf] %v198
    %207 = vst [vmem:[#allocation3 + $0x1c] sm:$0xf] %v199
    // Predicated region
    $region46: #{tpu_custom_call.1} parent=1 // pred_check
      %p208 = pneg %p76
    $region47: #{tpu_custom_call.1} parent=1 // pred_check_branch
      %210 = sbr.rel (%p208) target = $region49
    $region48: #{tpu_custom_call.1} parent=1 // pred_region
      %v211 = vld [vmem:[#allocation2] sm:$0xf]
      %v212 = vld [vmem:[#allocation2 + $0x4] sm:$0xf]
      %v213 = vld [vmem:[#allocation2 + $0x8] sm:$0xf]
      %v214 = vld [vmem:[#allocation2 + $0xc] sm:$0xf]
      %v215 = vld [vmem:[#allocation2 + $0x10] sm:$0xf]
      %v216 = vld [vmem:[#allocation2 + $0x14] sm:$0xf]
      %v217 = vld [vmem:[#allocation2 + $0x18] sm:$0xf]
      %v218 = vld [vmem:[#allocation2 + $0x1c] sm:$0xf]
      %vm219 = vcmask 1043456
      %v220 = vsel %vm219, %v211, -inf
      %221 = vmax.xlane.f32.xlu0 %v220
      %v222 = vpop.xlane.xlu0 %221
      %v223 = vsel %vm219, %v212, -inf
      %224 = vmax.xlane.f32.xlu0 %v223
      %v225 = vpop.xlane.xlu0 %224
      %v226 = vsel %vm219, %v213, -inf
      %227 = vmax.xlane.f32.xlu0 %v226
      %v228 = vpop.xlane.xlu0 %227
      %v229 = vsel %vm219, %v214, -inf
      %230 = vmax.xlane.f32.xlu0 %v229
      %v231 = vpop.xlane.xlu0 %230
      %v232 = vsel %vm219, %v215, -inf
      %233 = vmax.xlane.f32.xlu0 %v232
      %v234 = vpop.xlane.xlu0 %233
      %v235 = vsel %vm219, %v216, -inf
      %236 = vmax.xlane.f32.xlu0 %v235
      %v237 = vpop.xlane.xlu0 %236
      %v238 = vsel %vm219, %v217, -inf
      %239 = vmax.xlane.f32.xlu0 %v238
      %v240 = vpop.xlane.xlu0 %239
      %v241 = vsel %vm219, %v218, -inf
      %242 = vmax.xlane.f32.xlu0 %v241
      %v243 = vpop.xlane.xlu0 %242
      %v244 = vmin.f32 %v222, 20.0
      %v245 = vmin.f32 %v225, 20.0
      %v246 = vmin.f32 %v228, 20.0
      %v247 = vmin.f32 %v231, 20.0
      %v248 = vmin.f32 %v234, 20.0
      %v249 = vmin.f32 %v237, 20.0
      %v250 = vmin.f32 %v240, 20.0
      %v251 = vmin.f32 %v243, 20.0
      %v252 = vmul.f32 %v244, 1.442695
      %v253 = vpow.pop %v252
      %v254 = vmul.f32 %v245, 1.442695
      %v255 = vpow.pop %v254
      %v256 = vmul.f32 %v246, 1.442695
      %v257 = vpow.pop %v256
      %v258 = vmul.f32 %v247, 1.442695
      %v259 = vpow.pop %v258
      %v260 = vmul.f32 %v248, 1.442695
      %v261 = vpow.pop %v260
      %v262 = vmul.f32 %v249, 1.442695
      %v263 = vpow.pop %v262
      %v264 = vmul.f32 %v250, 1.442695
      %v265 = vpow.pop %v264
      %v266 = vmul.f32 %v251, 1.442695
      %v267 = vpow.pop %v266
      %v268 = vadd.f32 %v253, 2.0
      %v269 = vadd.f32 %v255, 2.0
      %v270 = vadd.f32 %v257, 2.0
      %v271 = vadd.f32 %v259, 2.0
      %v272 = vadd.f32 %v261, 2.0
      %v273 = vadd.f32 %v263, 2.0
      %v274 = vadd.f32 %v265, 2.0
      %v275 = vadd.f32 %v267, 2.0
      %v276 = vmul.f32 %v253, %v268
      %v277 = vmul.f32 %v255, %v269
      %v278 = vmul.f32 %v257, %v270
      %v279 = vmul.f32 %v259, %v271
      %v280 = vmul.f32 %v261, %v272
      %v281 = vmul.f32 %v263, %v273
      %v282 = vmul.f32 %v265, %v274
      %v283 = vmul.f32 %v267, %v275
      %v284 = vadd.f32 %v276, 2.0
      %v285 = vadd.f32 %v277, 2.0
      %v286 = vadd.f32 %v278, 2.0
      %v287 = vadd.f32 %v279, 2.0
      %v288 = vadd.f32 %v280, 2.0
      %v289 = vadd.f32 %v281, 2.0
      %v290 = vadd.f32 %v282, 2.0
      %v291 = vadd.f32 %v283, 2.0
      %v292 = vrcp.pop %v284
      %v293 = vrcp.pop %v285
      %v294 = vrcp.pop %v286
      %v295 = vrcp.pop %v287
      %v296 = vrcp.pop %v288
      %v297 = vrcp.pop %v289
      %v298 = vrcp.pop %v290
      %v299 = vrcp.pop %v291
      %v300 = vmul.f32 %v276, %v292
      %v301 = vmul.f32 %v277, %v293
      %v302 = vmul.f32 %v278, %v294
      %v303 = vmul.f32 %v279, %v295
      %v304 = vmul.f32 %v280, %v296
      %v305 = vmul.f32 %v281, %v297
      %v306 = vmul.f32 %v282, %v298
      %v307 = vmul.f32 %v283, %v299
      %vm308 = vcmp.gt.f32.partialorder %v222, 20.0
      %vm309 = vcmp.gt.f32.partialorder %v225, 20.0
      %vm310 = vcmp.gt.f32.partialorder %v228, 20.0
      %vm311 = vcmp.gt.f32.partialorder %v231, 20.0
      %vm312 = vcmp.gt.f32.partialorder %v234, 20.0
      %vm313 = vcmp.gt.f32.partialorder %v237, 20.0
      %vm314 = vcmp.gt.f32.partialorder %v240, 20.0
      %vm315 = vcmp.gt.f32.partialorder %v243, 20.0
      %v316 = vsel %vm308, 1.0, %v300
      %v317 = vsel %vm309, 1.0, %v301
      %v318 = vsel %vm310, 1.0, %v302
      %v319 = vsel %vm311, 1.0, %v303
      %v320 = vsel %vm312, 1.0, %v304
      %v321 = vsel %vm313, 1.0, %v305
      %v322 = vsel %vm314, 1.0, %v306
      %v323 = vsel %vm315, 1.0, %v307
      %v324 = vmul.f32 %v222, %v316
      %v325 = vmul.f32 %v225, %v317
      %v326 = vmul.f32 %v228, %v318
      %v327 = vmul.f32 %v231, %v319
      %v328 = vmul.f32 %v234, %v320
      %v329 = vmul.f32 %v237, %v321
      %v330 = vmul.f32 %v240, %v322
      %v331 = vmul.f32 %v243, %v323
      %v332 = vld [vmem:[#allocation3] sm:$0xf]
      %v333 = vld [vmem:[#allocation3 + $0x4] sm:$0xf]
      %v334 = vld [vmem:[#allocation3 + $0x8] sm:$0xf]
      %v335 = vld [vmem:[#allocation3 + $0xc] sm:$0xf]
      %v336 = vld [vmem:[#allocation3 + $0x10] sm:$0xf]
      %v337 = vld [vmem:[#allocation3 + $0x14] sm:$0xf]
      %v338 = vld [vmem:[#allocation3 + $0x18] sm:$0xf]
      %v339 = vld [vmem:[#allocation3 + $0x1c] sm:$0xf]
      %v340 = vsel %vm219, %v332, 0.0
      %341 = vadd.xlane.f32.xlu0 %v340
      %v342 = vpop.xlane.xlu0 %341
      %v343 = vsel %vm219, %v333, 0.0
      %344 = vadd.xlane.f32.xlu0 %v343
      %v345 = vpop.xlane.xlu0 %344
      %v346 = vsel %vm219, %v334, 0.0
      %347 = vadd.xlane.f32.xlu0 %v346
      %v348 = vpop.xlane.xlu0 %347
      %v349 = vsel %vm219, %v335, 0.0
      %350 = vadd.xlane.f32.xlu0 %v349
      %v351 = vpop.xlane.xlu0 %350
      %v352 = vsel %vm219, %v336, 0.0
      %353 = vadd.xlane.f32.xlu0 %v352
      %v354 = vpop.xlane.xlu0 %353
      %v355 = vsel %vm219, %v337, 0.0
      %356 = vadd.xlane.f32.xlu0 %v355
      %v357 = vpop.xlane.xlu0 %356
      %v358 = vsel %vm219, %v338, 0.0
      %359 = vadd.xlane.f32.xlu0 %v358
      %v360 = vpop.xlane.xlu0 %359
      %v361 = vsel %vm219, %v339, 0.0
      %362 = vadd.xlane.f32.xlu0 %v361
      %v363 = vpop.xlane.xlu0 %362
      %v364 = vmul.f32 %v342, 0.00390625
      %v365 = vmul.f32 %v345, 0.00390625
      %v366 = vmul.f32 %v348, 0.00390625
      %v367 = vmul.f32 %v351, 0.00390625
      %v368 = vmul.f32 %v354, 0.00390625
      %v369 = vmul.f32 %v357, 0.00390625
      %v370 = vmul.f32 %v360, 0.00390625
      %v371 = vmul.f32 %v363, 0.00390625
      %v372 = vmin.f32 %v364, 20.0
      %v373 = vmin.f32 %v365, 20.0
      %v374 = vmin.f32 %v366, 20.0
      %v375 = vmin.f32 %v367, 20.0
      %v376 = vmin.f32 %v368, 20.0
      %v377 = vmin.f32 %v369, 20.0
      %v378 = vmin.f32 %v370, 20.0
      %v379 = vmin.f32 %v371, 20.0
      %v380 = vmul.f32 %v372, 1.442695
      %v381 = vpow.pop %v380
      %v382 = vmul.f32 %v373, 1.442695
      %v383 = vpow.pop %v382
      %v384 = vmul.f32 %v374, 1.442695
      %v385 = vpow.pop %v384
      %v386 = vmul.f32 %v375, 1.442695
      %v387 = vpow.pop %v386
      %v388 = vmul.f32 %v376, 1.442695
      %v389 = vpow.pop %v388
      %v390 = vmul.f32 %v377, 1.442695
      %v391 = vpow.pop %v390
      %v392 = vmul.f32 %v378, 1.442695
      %v393 = vpow.pop %v392
      %v394 = vmul.f32 %v379, 1.442695
      %v395 = vpow.pop %v394
      %v396 = vadd.f32 %v381, 2.0
      %v397 = vadd.f32 %v383, 2.0
      %v398 = vadd.f32 %v385, 2.0
      %v399 = vadd.f32 %v387, 2.0
      %v400 = vadd.f32 %v389, 2.0
      %v401 = vadd.f32 %v391, 2.0
      %v402 = vadd.f32 %v393, 2.0
      %v403 = vadd.f32 %v395, 2.0
      %v404 = vmul.f32 %v381, %v396
      %v405 = vmul.f32 %v383, %v397
      %v406 = vmul.f32 %v385, %v398
      %v407 = vmul.f32 %v387, %v399
      %v408 = vmul.f32 %v389, %v400
      %v409 = vmul.f32 %v391, %v401
      %v410 = vmul.f32 %v393, %v402
      %v411 = vmul.f32 %v395, %v403
      %v412 = vadd.f32 %v404, 2.0
      %v413 = vadd.f32 %v405, 2.0
      %v414 = vadd.f32 %v406, 2.0
      %v415 = vadd.f32 %v407, 2.0
      %v416 = vadd.f32 %v408, 2.0
      %v417 = vadd.f32 %v409, 2.0
      %v418 = vadd.f32 %v410, 2.0
      %v419 = vadd.f32 %v411, 2.0
      %v420 = vrcp.pop %v412
      %v421 = vrcp.pop %v413
      %v422 = vrcp.pop %v414
      %v423 = vrcp.pop %v415
      %v424 = vrcp.pop %v416
      %v425 = vrcp.pop %v417
      %v426 = vrcp.pop %v418
      %v427 = vrcp.pop %v419
      %v428 = vmul.f32 %v404, %v420
      %v429 = vmul.f32 %v405, %v421
      %v430 = vmul.f32 %v406, %v422
      %v431 = vmul.f32 %v407, %v423
      %v432 = vmul.f32 %v408, %v424
      %v433 = vmul.f32 %v409, %v425
      %v434 = vmul.f32 %v410, %v426
      %v435 = vmul.f32 %v411, %v427
      %vm436 = vcmp.gt.f32.partialorder %v364, 20.0
      %vm437 = vcmp.gt.f32.partialorder %v365, 20.0
      %vm438 = vcmp.gt.f32.partialorder %v366, 20.0
      %vm439 = vcmp.gt.f32.partialorder %v367, 20.0
      %vm440 = vcmp.gt.f32.partialorder %v368, 20.0
      %vm441 = vcmp.gt.f32.partialorder %v369, 20.0
      %vm442 = vcmp.gt.f32.partialorder %v370, 20.0
      %vm443 = vcmp.gt.f32.partialorder %v371, 20.0
      %v444 = vsel %vm436, 1.0, %v428
      %v445 = vsel %vm437, 1.0, %v429
      %v446 = vsel %vm438, 1.0, %v430
      %v447 = vsel %vm439, 1.0, %v431
      %v448 = vsel %vm440, 1.0, %v432
      %v449 = vsel %vm441, 1.0, %v433
      %v450 = vsel %vm442, 1.0, %v434
      %v451 = vsel %vm443, 1.0, %v435
      %v452 = vmul.f32 %v364, %v444
      %v453 = vmul.f32 %v365, %v445
      %v454 = vmul.f32 %v366, %v446
      %v455 = vmul.f32 %v367, %v447
      %v456 = vmul.f32 %v368, %v448
      %v457 = vmul.f32 %v369, %v449
      %v458 = vmul.f32 %v370, %v450
      %v459 = vmul.f32 %v371, %v451
      %v460 = vpack.c.bf16 %v324, %v324
      %v461 = vpack.c.bf16 %v325, %v325
      %v462 = vpack.c.bf16 %v326, %v326
      %v463 = vpack.c.bf16 %v327, %v327
      %v464 = vpack.c.bf16 %v328, %v328
      %v465 = vpack.c.bf16 %v329, %v329
      %v466 = vpack.c.bf16 %v330, %v330
      %v467 = vpack.c.bf16 %v331, %v331
      %v468 = vld [vmem:[#allocation7] sm:$0xff]
      %v469 = vpack.c.bf16 %v452, %v452
      %v470 = vpack.c.bf16 %v453, %v453
      %v471 = vpack.c.bf16 %v454, %v454
      %v472 = vpack.c.bf16 %v455, %v455
      %v473 = vpack.c.bf16 %v456, %v456
      %v474 = vpack.c.bf16 %v457, %v457
      %v475 = vpack.c.bf16 %v458, %v458
      %v476 = vpack.c.bf16 %v459, %v459
      %v477 = vld [vmem:[#allocation9] sm:$0xff]
      %v486 = vunpack.c.l.b16 %v469
      %v487 = vunpack.c.l.b16 %v470
      %v488 = vunpack.c.l.b16 %v471
      %v489 = vunpack.c.l.b16 %v472
      %v490 = vunpack.c.l.b16 %v473
      %v491 = vunpack.c.l.b16 %v474
      %v492 = vunpack.c.l.b16 %v475
      %v493 = vunpack.c.l.b16 %v476
      %v494 = vlaneseq
      %v495 = vand.u32 %v494, 127
      %v496 = vlaneseq
      %v497 = vshrl.u32 %v496, 7
      %v498 = vsub.s32 %v495, %v497
      %v499 = vrot.slane %v486, %v498
      %v500 = vlaneseq
      %v501 = vshrl.u32 %v500, 7
      %v502 = vsub.s32 %v495, %v501
      %v503 = vrot.slane %v487, %v502
      %v504 = vlaneseq
      %v505 = vshrl.u32 %v504, 7
      %v506 = vsub.s32 %v495, %v505
      %v507 = vrot.slane %v488, %v506
      %v508 = vlaneseq
      %v509 = vshrl.u32 %v508, 7
      %v510 = vsub.s32 %v495, %v509
      %v511 = vrot.slane %v489, %v510
      %v512 = vlaneseq
      %v513 = vshrl.u32 %v512, 7
      %v514 = vsub.s32 %v495, %v513
      %v515 = vrot.slane %v490, %v514
      %v516 = vlaneseq
      %v517 = vshrl.u32 %v516, 7
      %v518 = vsub.s32 %v495, %v517
      %v519 = vrot.slane %v491, %v518
      %v520 = vlaneseq
      %v521 = vshrl.u32 %v520, 7
      %v522 = vsub.s32 %v495, %v521
      %v523 = vrot.slane %v492, %v522
      %v524 = vlaneseq
      %v525 = vshrl.u32 %v524, 7
      %v526 = vsub.s32 %v495, %v525
      %v527 = vrot.slane %v493, %v526
      %vm528 = vcmask 1041409
      %v529 = vsel %vm528, %v503, %v499
      %vm530 = vcmask 1042434
      %v531 = vsel %vm530, %v507, %v529
      %vm532 = vcmask 1043459
      %v533 = vsel %vm532, %v511, %v531
      %vm534 = vcmask 1044484
      %v535 = vsel %vm534, %v515, %v533
      %vm536 = vcmask 1045509
      %v537 = vsel %vm536, %v519, %v535
      %vm538 = vcmask 1046534
      %v539 = vsel %vm538, %v523, %v537
      %vm540 = vcmask 1047559
      %v541 = vsel %vm540, %v527, %v539
      %v542 = vpack.c.b16 %v541, %v541
      %v544 = vcombine.high %v477, %v477
      %v546 = vunpack.c.l.s4 1983009808
      %v547 = vunpack.c.0.s8 %v546
      %v548 = vlaneseq
      %v549 = vshrl.u32 %v548, 7
      %v550 = vsub.s32 %v547, %v549
      %v551 = vrot.slane %v477, %v550
      %v553 = vunpack.c.l.s4 1983009808
      %v554 = vunpack.c.0.s8 %v553
      %v555 = vlaneseq
      %v556 = vshrl.u32 %v555, 7
      %v557 = vsub.s32 %v554, %v556
      %v558 = vrot.slane %v544, %v557
      %v559 = vcombine.high %v551, %v551
      %v560 = vcombine.high %v558, %v558
      %vm561 = vcmask 31744
      %v563 = vsel %vm561, %v542, 0
      %vm565 = vcmask 1041408
      %v567 = vsel %vm565, %v551, 0
      %v570 = vsel %vm565, %v559, 0
      %v573 = vsel %vm565, %v558, 0
      %v576 = vsel %vm565, %v560, 0
      %578 = vmatprep.subr.bf16.mxu0 0
      %579 = vmatpush1.bf16.msra.mxu0 0
      %580 = vmatprep.subr.bf16.mxu0 0
      %581 = vmatpush1.bf16.msra.mxu0 0
      %582 = vmatprep.subr.bf16.mxu0 0
      %583 = vmatpush1.bf16.msra.mxu0 0
      %584 = vmatprep.subr.bf16.mxu0 0
      %585 = vmatpush1.bf16.msra.mxu0 0
      %586 = vmatprep.subr.bf16.mxu0 0
      %587 = vmatpush1.bf16.msra.mxu0 0
      %588 = vmatprep.subr.bf16.mxu0 0
      %589 = vmatpush1.bf16.msra.mxu0 0
      %590 = vmatprep.subr.bf16.mxu0 0
      %591 = vmatpush1.bf16.msra.mxu0 0
      %592 = vmatprep.subr.bf16.mxu0 %v570
      %593 = vmatpush1.bf16.msra.mxu0 %v567
      %594 = vmatprep.subr.bf16.mxu0 0
      %595 = vmatpush2.bf16.msra.mxu0 0
      %596 = vmatprep.subr.bf16.mxu0 0
      %597 = vmatpush2.bf16.msra.mxu0 0
      %598 = vmatprep.subr.bf16.mxu0 0
      %599 = vmatpush2.bf16.msra.mxu0 0
      %600 = vmatprep.subr.bf16.mxu0 0
      %601 = vmatpush2.bf16.msra.mxu0 0
      %602 = vmatprep.subr.bf16.mxu0 0
      %603 = vmatpush2.bf16.msra.mxu0 0
      %604 = vmatprep.subr.bf16.mxu0 0
      %605 = vmatpush2.bf16.msra.mxu0 0
      %606 = vmatprep.subr.bf16.mxu0 0
      %607 = vmatpush2.bf16.msra.mxu0 0
      %608 = vmatprep.subr.bf16.mxu0 0
      %609 = vmatpush2.bf16.msra.mxu0 0
      %610 = vmatprep.mubr.bf16.mxu0 0
      %611 = vmatmul.mubr.bf16.gmra.mxu0 %v563
      %v612 = vpop.f32.mrf.mxu0
      %v613 = vadd.f32 0.0, %v612
      %v614 = vpop.f32.mrf.mxu0
      %v615 = vadd.f32 0.0, %v614
      %v616 = vpop.f32.mrf.mxu0
      %v617 = vpop.f32.mrf.mxu0
      %618 = vdwg.mxu0
      %619 = vmatprep.subr.bf16.mxu0 0
      %620 = vmatpush1.bf16.msra.mxu0 0
      %621 = vmatprep.subr.bf16.mxu0 0
      %622 = vmatpush1.bf16.msra.mxu0 0
      %623 = vmatprep.subr.bf16.mxu0 0
      %624 = vmatpush1.bf16.msra.mxu0 0
      %625 = vmatprep.subr.bf16.mxu0 0
      %626 = vmatpush1.bf16.msra.mxu0 0
      %627 = vmatprep.subr.bf16.mxu0 0
      %628 = vmatpush1.bf16.msra.mxu0 0
      %629 = vmatprep.subr.bf16.mxu0 0
      %630 = vmatpush1.bf16.msra.mxu0 0
      %631 = vmatprep.subr.bf16.mxu0 0
      %632 = vmatpush1.bf16.msra.mxu0 0
      %633 = vmatprep.subr.bf16.mxu0 %v576
      %634 = vmatpush1.bf16.msra.mxu0 %v573
      %635 = vmatprep.subr.bf16.mxu0 0
      %636 = vmatpush2.bf16.msra.mxu0 0
      %637 = vmatprep.subr.bf16.mxu0 0
      %638 = vmatpush2.bf16.msra.mxu0 0
      %639 = vmatprep.subr.bf16.mxu0 0
      %640 = vmatpush2.bf16.msra.mxu0 0
      %641 = vmatprep.subr.bf16.mxu0 0
      %642 = vmatpush2.bf16.msra.mxu0 0
      %643 = vmatprep.subr.bf16.mxu0 0
      %644 = vmatpush2.bf16.msra.mxu0 0
      %645 = vmatprep.subr.bf16.mxu0 0
      %646 = vmatpush2.bf16.msra.mxu0 0
      %647 = vmatprep.subr.bf16.mxu0 0
      %648 = vmatpush2.bf16.msra.mxu0 0
      %649 = vmatprep.subr.bf16.mxu0 0
      %650 = vmatpush2.bf16.msra.mxu0 0
      %651 = vmatprep.mubr.bf16.mxu0 0
      %652 = vmatmul.mubr.bf16.gmra.mxu0 %v563
      %v653 = vpop.f32.mrf.mxu0
      %v654 = vadd.f32 0.0, %v653
      %v655 = vpop.f32.mrf.mxu0
      %v656 = vadd.f32 0.0, %v655
      %v657 = vpop.f32.mrf.mxu0
      %v658 = vpop.f32.mrf.mxu0
      %659 = vdwg.mxu0
      %v668 = vunpack.c.l.b16 %v460
      %v669 = vunpack.c.l.b16 %v461
      %v670 = vunpack.c.l.b16 %v462
      %v671 = vunpack.c.l.b16 %v463
      %v672 = vunpack.c.l.b16 %v464
      %v673 = vunpack.c.l.b16 %v465
      %v674 = vunpack.c.l.b16 %v466
      %v675 = vunpack.c.l.b16 %v467
      %v676 = vlaneseq
      %v677 = vshrl.u32 %v676, 7
      %v678 = vsub.s32 %v495, %v677
      %v679 = vrot.slane %v668, %v678
      %v680 = vlaneseq
      %v681 = vshrl.u32 %v680, 7
      %v682 = vsub.s32 %v495, %v681
      %v683 = vrot.slane %v669, %v682
      %v684 = vlaneseq
      %v685 = vshrl.u32 %v684, 7
      %v686 = vsub.s32 %v495, %v685
      %v687 = vrot.slane %v670, %v686
      %v688 = vlaneseq
      %v689 = vshrl.u32 %v688, 7
      %v690 = vsub.s32 %v495, %v689
      %v691 = vrot.slane %v671, %v690
      %v692 = vlaneseq
      %v693 = vshrl.u32 %v692, 7
      %v694 = vsub.s32 %v495, %v693
      %v695 = vrot.slane %v672, %v694
      %v696 = vlaneseq
      %v697 = vshrl.u32 %v696, 7
      %v698 = vsub.s32 %v495, %v697
      %v699 = vrot.slane %v673, %v698
      %v700 = vlaneseq
      %v701 = vshrl.u32 %v700, 7
      %v702 = vsub.s32 %v495, %v701
      %v703 = vrot.slane %v674, %v702
      %v704 = vlaneseq
      %v705 = vshrl.u32 %v704, 7
      %v706 = vsub.s32 %v495, %v705
      %v707 = vrot.slane %v675, %v706
      %v708 = vsel %vm528, %v683, %v679
      %v709 = vsel %vm530, %v687, %v708
      %v710 = vsel %vm532, %v691, %v709
      %v711 = vsel %vm534, %v695, %v710
      %v712 = vsel %vm536, %v699, %v711
      %v713 = vsel %vm538, %v703, %v712
      %v714 = vsel %vm540, %v707, %v713
      %v715 = vpack.c.b16 %v714, %v714
      %v717 = vcombine.high %v468, %v468
      %v719 = vunpack.c.l.s4 1983009808
      %v720 = vunpack.c.0.s8 %v719
      %v721 = vlaneseq
      %v722 = vshrl.u32 %v721, 7
      %v723 = vsub.s32 %v720, %v722
      %v724 = vrot.slane %v468, %v723
      %v726 = vunpack.c.l.s4 1983009808
      %v727 = vunpack.c.0.s8 %v726
      %v728 = vlaneseq
      %v729 = vshrl.u32 %v728, 7
      %v730 = vsub.s32 %v727, %v729
      %v731 = vrot.slane %v717, %v730
      %v732 = vcombine.high %v724, %v724
      %v733 = vcombine.high %v731, %v731
      %v735 = vsel %vm561, %v715, 0
      %v738 = vsel %vm565, %v724, 0
      %v741 = vsel %vm565, %v732, 0
      %v744 = vsel %vm565, %v731, 0
      %v747 = vsel %vm565, %v733, 0
      %749 = vmatprep.subr.bf16.mxu0 0
      %750 = vmatpush1.bf16.msra.mxu0 0
      %751 = vmatprep.subr.bf16.mxu0 0
      %752 = vmatpush1.bf16.msra.mxu0 0
      %753 = vmatprep.subr.bf16.mxu0 0
      %754 = vmatpush1.bf16.msra.mxu0 0
      %755 = vmatprep.subr.bf16.mxu0 0
      %756 = vmatpush1.bf16.msra.mxu0 0
      %757 = vmatprep.subr.bf16.mxu0 0
      %758 = vmatpush1.bf16.msra.mxu0 0
      %759 = vmatprep.subr.bf16.mxu0 0
      %760 = vmatpush1.bf16.msra.mxu0 0
      %761 = vmatprep.subr.bf16.mxu0 0
      %762 = vmatpush1.bf16.msra.mxu0 0
      %763 = vmatprep.subr.bf16.mxu0 %v741
      %764 = vmatpush1.bf16.msra.mxu0 %v738
      %765 = vmatprep.subr.bf16.mxu0 0
      %766 = vmatpush2.bf16.msra.mxu0 0
      %767 = vmatprep.subr.bf16.mxu0 0
      %768 = vmatpush2.bf16.msra.mxu0 0
      %769 = vmatprep.subr.bf16.mxu0 0
      %770 = vmatpush2.bf16.msra.mxu0 0
      %771 = vmatprep.subr.bf16.mxu0 0
      %772 = vmatpush2.bf16.msra.mxu0 0
      %773 = vmatprep.subr.bf16.mxu0 0
      %774 = vmatpush2.bf16.msra.mxu0 0
      %775 = vmatprep.subr.bf16.mxu0 0
      %776 = vmatpush2.bf16.msra.mxu0 0
      %777 = vmatprep.subr.bf16.mxu0 0
      %778 = vmatpush2.bf16.msra.mxu0 0
      %779 = vmatprep.subr.bf16.mxu0 0
      %780 = vmatpush2.bf16.msra.mxu0 0
      %781 = vmatprep.mubr.bf16.mxu0 0
      %782 = vmatmul.mubr.bf16.gmra.mxu0 %v735
      %v783 = vpop.f32.mrf.mxu0
      %v784 = vadd.f32 %v613, %v783
      %v785 = vpop.f32.mrf.mxu0
      %v786 = vadd.f32 %v615, %v785
      %v787 = vpop.f32.mrf.mxu0
      %v788 = vpop.f32.mrf.mxu0
      %789 = vdwg.mxu0
      %790 = vmatprep.subr.bf16.mxu0 0
      %791 = vmatpush1.bf16.msra.mxu0 0
      %792 = vmatprep.subr.bf16.mxu0 0
      %793 = vmatpush1.bf16.msra.mxu0 0
      %794 = vmatprep.subr.bf16.mxu0 0
      %795 = vmatpush1.bf16.msra.mxu0 0
      %796 = vmatprep.subr.bf16.mxu0 0
      %797 = vmatpush1.bf16.msra.mxu0 0
      %798 = vmatprep.subr.bf16.mxu0 0
      %799 = vmatpush1.bf16.msra.mxu0 0
      %800 = vmatprep.subr.bf16.mxu0 0
      %801 = vmatpush1.bf16.msra.mxu0 0
      %802 = vmatprep.subr.bf16.mxu0 0
      %803 = vmatpush1.bf16.msra.mxu0 0
      %804 = vmatprep.subr.bf16.mxu0 %v747
      %805 = vmatpush1.bf16.msra.mxu0 %v744
      %806 = vmatprep.subr.bf16.mxu0 0
      %807 = vmatpush2.bf16.msra.mxu0 0
      %808 = vmatprep.subr.bf16.mxu0 0
      %809 = vmatpush2.bf16.msra.mxu0 0
      %810 = vmatprep.subr.bf16.mxu0 0
      %811 = vmatpush2.bf16.msra.mxu0 0
      %812 = vmatprep.subr.bf16.mxu0 0
      %813 = vmatpush2.bf16.msra.mxu0 0
      %814 = vmatprep.subr.bf16.mxu0 0
      %815 = vmatpush2.bf16.msra.mxu0 0
      %816 = vmatprep.subr.bf16.mxu0 0
      %817 = vmatpush2.bf16.msra.mxu0 0
      %818 = vmatprep.subr.bf16.mxu0 0
      %819 = vmatpush2.bf16.msra.mxu0 0
      %820 = vmatprep.subr.bf16.mxu0 0
      %821 = vmatpush2.bf16.msra.mxu0 0
      %822 = vmatprep.mubr.bf16.mxu0 0
      %823 = vmatmul.mubr.bf16.gmra.mxu0 %v735
      %v824 = vpop.f32.mrf.mxu0
      %v825 = vadd.f32 %v654, %v824
      %v826 = vpop.f32.mrf.mxu0
      %v827 = vadd.f32 %v656, %v826
      %v828 = vpop.f32.mrf.mxu0
      %v829 = vpop.f32.mrf.mxu0
      %830 = vdwg.mxu0
      %v831 = vld [vmem:[%s3] sm:$0xf]
      %v833 = vlaneseq
      %v834 = vshrl.u32 %v833, 7
      %v835 = vsub.s32 0, %v834
      %v836 = vrot.slane %v831, %v835
      %v837 = vlaneseq
      %v838 = vshrl.u32 %v837, 7
      %v839 = vsub.s32 1, %v838
      %v840 = vrot.slane %v831, %v839
      %v841 = vlaneseq
      %v842 = vshrl.u32 %v841, 7
      %v843 = vsub.s32 2, %v842
      %v844 = vrot.slane %v831, %v843
      %v845 = vlaneseq
      %v846 = vshrl.u32 %v845, 7
      %v847 = vsub.s32 3, %v846
      %v848 = vrot.slane %v831, %v847
      %v853 = vadd.f32 %v784, %v836
      %v854 = vadd.f32 %v786, %v840
      %v855 = vadd.f32 %v825, %v844
      %v856 = vadd.f32 %v827, %v848
      %v857 = vmin.f32 %v853, 20.0
      %v858 = vmin.f32 %v854, 20.0
      %v859 = vmin.f32 %v855, 20.0
      %v860 = vmin.f32 %v856, 20.0
      %v861 = vmul.f32 %v857, 1.442695
      %v862 = vpow.pop %v861
      %v863 = vmul.f32 %v858, 1.442695
      %v864 = vpow.pop %v863
      %v865 = vmul.f32 %v859, 1.442695
      %v866 = vpow.pop %v865
      %v867 = vmul.f32 %v860, 1.442695
      %v868 = vpow.pop %v867
      %v869 = vadd.f32 %v862, 2.0
      %v870 = vadd.f32 %v864, 2.0
      %v871 = vadd.f32 %v866, 2.0
      %v872 = vadd.f32 %v868, 2.0
      %v873 = vmul.f32 %v862, %v869
      %v874 = vmul.f32 %v864, %v870
      %v875 = vmul.f32 %v866, %v871
      %v876 = vmul.f32 %v868, %v872
      %v877 = vadd.f32 %v873, 2.0
      %v878 = vadd.f32 %v874, 2.0
      %v879 = vadd.f32 %v875, 2.0
      %v880 = vadd.f32 %v876, 2.0
      %v881 = vrcp.pop %v877
      %v882 = vrcp.pop %v878
      %v883 = vrcp.pop %v879
      %v884 = vrcp.pop %v880
      %v885 = vmul.f32 %v873, %v881
      %v886 = vmul.f32 %v874, %v882
      %v887 = vmul.f32 %v875, %v883
      %v888 = vmul.f32 %v876, %v884
      %vm889 = vcmp.gt.f32.partialorder %v853, 20.0
      %vm890 = vcmp.gt.f32.partialorder %v854, 20.0
      %vm891 = vcmp.gt.f32.partialorder %v855, 20.0
      %vm892 = vcmp.gt.f32.partialorder %v856, 20.0
      %v893 = vsel %vm889, 1.0, %v885
      %v894 = vsel %vm890, 1.0, %v886
      %v895 = vsel %vm891, 1.0, %v887
      %v896 = vsel %vm892, 1.0, %v888
      %v897 = vmul.f32 %v853, %v893
      %v898 = vmul.f32 %v854, %v894
      %v899 = vmul.f32 %v855, %v895
      %v900 = vmul.f32 %v856, %v896
      %v901 = vpack.c.bf16 %v897, %v897
      %v902 = vpack.c.bf16 %v898, %v898
      %v903 = vpack.c.bf16 %v899, %v899
      %v904 = vpack.c.bf16 %v900, %v900
      %v905 = vld [vmem:[#allocation10] sm:$0xf]
      %v906 = vld [vmem:[#allocation10 + $0x4] sm:$0xf]
      %v907 = vld [vmem:[#allocation10 + $0x8] sm:$0xf]
      %v908 = vld [vmem:[#allocation10 + $0xc] sm:$0xf]
      %v909 = vld [vmem:[#allocation10 + $0x10] sm:$0xf]
      %v910 = vld [vmem:[#allocation10 + $0x14] sm:$0xf]
      %v911 = vld [vmem:[#allocation10 + $0x18] sm:$0xf]
      %v912 = vld [vmem:[#allocation10 + $0x1c] sm:$0xf]
      %v913 = vld [vmem:[#allocation10 + $0x20] sm:$0xf]
      %v914 = vld [vmem:[#allocation10 + $0x24] sm:$0xf]
      %v915 = vld [vmem:[#allocation10 + $0x28] sm:$0xf]
      %v916 = vld [vmem:[#allocation10 + $0x2c] sm:$0xf]
      %v917 = vld [vmem:[#allocation10 + $0x30] sm:$0xf]
      %v918 = vld [vmem:[#allocation10 + $0x34] sm:$0xf]
      %v919 = vld [vmem:[#allocation10 + $0x38] sm:$0xf]
      %v920 = vld [vmem:[#allocation10 + $0x3c] sm:$0xf]
      %v921 = vld [vmem:[#allocation10 + $0x40] sm:$0xf]
      %v922 = vld [vmem:[#allocation10 + $0x44] sm:$0xf]
      %v923 = vld [vmem:[#allocation10 + $0x48] sm:$0xf]
      %v924 = vld [vmem:[#allocation10 + $0x4c] sm:$0xf]
      %v925 = vld [vmem:[#allocation10 + $0x50] sm:$0xf]
      %v926 = vld [vmem:[#allocation10 + $0x54] sm:$0xf]
      %v927 = vld [vmem:[#allocation10 + $0x58] sm:$0xf]
      %v928 = vld [vmem:[#allocation10 + $0x5c] sm:$0xf]
      %v929 = vld [vmem:[#allocation10 + $0x60] sm:$0xf]
      %v930 = vld [vmem:[#allocation10 + $0x64] sm:$0xf]
      %v931 = vld [vmem:[#allocation10 + $0x68] sm:$0xf]
      %v932 = vld [vmem:[#allocation10 + $0x6c] sm:$0xf]
      %v933 = vld [vmem:[#allocation10 + $0x70] sm:$0xf]
      %v934 = vld [vmem:[#allocation10 + $0x74] sm:$0xf]
      %v935 = vld [vmem:[#allocation10 + $0x78] sm:$0xf]
      %v936 = vld [vmem:[#allocation10 + $0x7c] sm:$0xf]
      %v937 = vld [vmem:[#allocation10 + $0x80] sm:$0xf]
      %v938 = vld [vmem:[#allocation10 + $0x84] sm:$0xf]
      %v939 = vld [vmem:[#allocation10 + $0x88] sm:$0xf]
      %v940 = vld [vmem:[#allocation10 + $0x8c] sm:$0xf]
      %v941 = vld [vmem:[#allocation10 + $0x90] sm:$0xf]
      %v942 = vld [vmem:[#allocation10 + $0x94] sm:$0xf]
      %v943 = vld [vmem:[#allocation10 + $0x98] sm:$0xf]
      %v944 = vld [vmem:[#allocation10 + $0x9c] sm:$0xf]
      %v945 = vld [vmem:[#allocation10 + $0xa0] sm:$0xf]
      %v946 = vld [vmem:[#allocation10 + $0xa4] sm:$0xf]
      %v947 = vld [vmem:[#allocation10 + $0xa8] sm:$0xf]
      %v948 = vld [vmem:[#allocation10 + $0xac] sm:$0xf]
      %v949 = vld [vmem:[#allocation10 + $0xb0] sm:$0xf]
      %v950 = vld [vmem:[#allocation10 + $0xb4] sm:$0xf]
      %v951 = vld [vmem:[#allocation10 + $0xb8] sm:$0xf]
      %v952 = vld [vmem:[#allocation10 + $0xbc] sm:$0xf]
      %v953 = vld [vmem:[#allocation10 + $0xc0] sm:$0xf]
      %v954 = vld [vmem:[#allocation10 + $0xc4] sm:$0xf]
      %v955 = vld [vmem:[#allocation10 + $0xc8] sm:$0xf]
      %v956 = vld [vmem:[#allocation10 + $0xcc] sm:$0xf]
      %v957 = vld [vmem:[#allocation10 + $0xd0] sm:$0xf]
      %v958 = vld [vmem:[#allocation10 + $0xd4] sm:$0xf]
      %v959 = vld [vmem:[#allocation10 + $0xd8] sm:$0xf]
      %v960 = vld [vmem:[#allocation10 + $0xdc] sm:$0xf]
      %v961 = vld [vmem:[#allocation10 + $0xe0] sm:$0xf]
      %v962 = vld [vmem:[#allocation10 + $0xe4] sm:$0xf]
      %v963 = vld [vmem:[#allocation10 + $0xe8] sm:$0xf]
      %v964 = vld [vmem:[#allocation10 + $0xec] sm:$0xf]
      %v965 = vld [vmem:[#allocation10 + $0xf0] sm:$0xf]
      %v966 = vld [vmem:[#allocation10 + $0xf4] sm:$0xf]
      %v967 = vld [vmem:[#allocation10 + $0xf8] sm:$0xf]
      %v968 = vld [vmem:[#allocation10 + $0xfc] sm:$0xf]
      %v969 = vld [vmem:[%s5] sm:$0x1]
      %v971 = vlaneseq
      %v972 = vshrl.u32 %v971, 7
      %v973 = vsub.s32 0, %v972
      %v974 = vrot.slane %v969, %v973
      %v1040 = vunpack.c.l.b16 %v905
      %v1041 = vunpack.c.l.b16 %v906
      %v1042 = vunpack.c.l.b16 %v907
      %v1043 = vunpack.c.l.b16 %v908
      %v1044 = vunpack.c.l.b16 %v909
      %v1045 = vunpack.c.l.b16 %v910
      %v1046 = vunpack.c.l.b16 %v911
      %v1047 = vunpack.c.l.b16 %v912
      %v1048 = vunpack.c.l.b16 %v913
      %v1049 = vunpack.c.l.b16 %v914
      %v1050 = vunpack.c.l.b16 %v915
      %v1051 = vunpack.c.l.b16 %v916
      %v1052 = vunpack.c.l.b16 %v917
      %v1053 = vunpack.c.l.b16 %v918
      %v1054 = vunpack.c.l.b16 %v919
      %v1055 = vunpack.c.l.b16 %v920
      %v1056 = vunpack.c.l.b16 %v921
      %v1057 = vunpack.c.l.b16 %v922
      %v1058 = vunpack.c.l.b16 %v923
      %v1059 = vunpack.c.l.b16 %v924
      %v1060 = vunpack.c.l.b16 %v925
      %v1061 = vunpack.c.l.b16 %v926
      %v1062 = vunpack.c.l.b16 %v927
      %v1063 = vunpack.c.l.b16 %v928
      %v1064 = vunpack.c.l.b16 %v929
      %v1065 = vunpack.c.l.b16 %v930
      %v1066 = vunpack.c.l.b16 %v931
      %v1067 = vunpack.c.l.b16 %v932
      %v1068 = vunpack.c.l.b16 %v933
      %v1069 = vunpack.c.l.b16 %v934
      %v1070 = vunpack.c.l.b16 %v935
      %v1071 = vunpack.c.l.b16 %v936
      %v1072 = vunpack.c.l.b16 %v937
      %v1073 = vunpack.c.l.b16 %v938
      %v1074 = vunpack.c.l.b16 %v939
      %v1075 = vunpack.c.l.b16 %v940
      %v1076 = vunpack.c.l.b16 %v941
      %v1077 = vunpack.c.l.b16 %v942
      %v1078 = vunpack.c.l.b16 %v943
      %v1079 = vunpack.c.l.b16 %v944
      %v1080 = vunpack.c.l.b16 %v945
      %v1081 = vunpack.c.l.b16 %v946
      %v1082 = vunpack.c.l.b16 %v947
      %v1083 = vunpack.c.l.b16 %v948
      %v1084 = vunpack.c.l.b16 %v949
      %v1085 = vunpack.c.l.b16 %v950
      %v1086 = vunpack.c.l.b16 %v951
      %v1087 = vunpack.c.l.b16 %v952
      %v1088 = vunpack.c.l.b16 %v953
      %v1089 = vunpack.c.l.b16 %v954
      %v1090 = vunpack.c.l.b16 %v955
      %v1091 = vunpack.c.l.b16 %v956
      %v1092 = vunpack.c.l.b16 %v957
      %v1093 = vunpack.c.l.b16 %v958
      %v1094 = vunpack.c.l.b16 %v959
      %v1095 = vunpack.c.l.b16 %v960
      %v1096 = vunpack.c.l.b16 %v961
      %v1097 = vunpack.c.l.b16 %v962
      %v1098 = vunpack.c.l.b16 %v963
      %v1099 = vunpack.c.l.b16 %v964
      %v1100 = vunpack.c.l.b16 %v965
      %v1101 = vunpack.c.l.b16 %v966
      %v1102 = vunpack.c.l.b16 %v967
      %v1103 = vunpack.c.l.b16 %v968
      %v1104 = vpack.c.b16 %v1041, %v1040
      %v1105 = vpack.c.b16 %v1043, %v1042
      %v1106 = vpack.c.b16 %v1045, %v1044
      %v1107 = vpack.c.b16 %v1047, %v1046
      %v1108 = vpack.c.b16 %v1049, %v1048
      %v1109 = vpack.c.b16 %v1051, %v1050
      %v1110 = vpack.c.b16 %v1053, %v1052
      %v1111 = vpack.c.b16 %v1055, %v1054
      %v1112 = vpack.c.b16 %v1057, %v1056
      %v1113 = vpack.c.b16 %v1059, %v1058
      %v1114 = vpack.c.b16 %v1061, %v1060
      %v1115 = vpack.c.b16 %v1063, %v1062
      %v1116 = vpack.c.b16 %v1065, %v1064
      %v1117 = vpack.c.b16 %v1067, %v1066
      %v1118 = vpack.c.b16 %v1069, %v1068
      %v1119 = vpack.c.b16 %v1071, %v1070
      %v1120 = vpack.c.b16 %v1073, %v1072
      %v1121 = vpack.c.b16 %v1075, %v1074
      %v1122 = vpack.c.b16 %v1077, %v1076
      %v1123 = vpack.c.b16 %v1079, %v1078
      %v1124 = vpack.c.b16 %v1081, %v1080
      %v1125 = vpack.c.b16 %v1083, %v1082
      %v1126 = vpack.c.b16 %v1085, %v1084
      %v1127 = vpack.c.b16 %v1087, %v1086
      %v1128 = vpack.c.b16 %v1089, %v1088
      %v1129 = vpack.c.b16 %v1091, %v1090
      %v1130 = vpack.c.b16 %v1093, %v1092
      %v1131 = vpack.c.b16 %v1095, %v1094
      %v1132 = vpack.c.b16 %v1097, %v1096
      %v1133 = vpack.c.b16 %v1099, %v1098
      %v1134 = vpack.c.b16 %v1101, %v1100
      %v1135 = vpack.c.b16 %v1103, %v1102
      %1168 = vmatprep.subr.bf16.mxu0 0
      %1169 = vmatpush1.bf16.msra.mxu0 %v1111
      %1170 = vmatprep.subr.bf16.mxu0 0
      %1171 = vmatpush1.bf16.msra.mxu0 %v1110
      %1172 = vmatprep.subr.bf16.mxu0 0
      %1173 = vmatpush1.bf16.msra.mxu0 %v1109
      %1174 = vmatprep.subr.bf16.mxu0 0
      %1175 = vmatpush1.bf16.msra.mxu0 %v1108
      %1176 = vmatprep.subr.bf16.mxu0 0
      %1177 = vmatpush1.bf16.msra.mxu0 %v1107
      %1178 = vmatprep.subr.bf16.mxu0 0
      %1179 = vmatpush1.bf16.msra.mxu0 %v1106
      %1180 = vmatprep.subr.bf16.mxu0 0
      %1181 = vmatpush1.bf16.msra.mxu0 %v1105
      %1182 = vmatprep.subr.bf16.mxu0 0
      %1183 = vmatpush1.bf16.msra.mxu0 %v1104
      %1184 = vmatprep.subr.bf16.mxu0 0
      %1185 = vmatpush2.bf16.msra.mxu0 %v1119
      %1186 = vmatprep.subr.bf16.mxu0 0
      %1187 = vmatpush2.bf16.msra.mxu0 %v1118
      %1188 = vmatprep.subr.bf16.mxu0 0
      %1189 = vmatpush2.bf16.msra.mxu0 %v1117
      %1190 = vmatprep.subr.bf16.mxu0 0
      %1191 = vmatpush2.bf16.msra.mxu0 %v1116
      %1192 = vmatprep.subr.bf16.mxu0 0
      %1193 = vmatpush2.bf16.msra.mxu0 %v1115
      %1194 = vmatprep.subr.bf16.mxu0 0
      %1195 = vmatpush2.bf16.msra.mxu0 %v1114
      %1196 = vmatprep.subr.bf16.mxu0 0
      %1197 = vmatpush2.bf16.msra.mxu0 %v1113
      %1198 = vmatprep.subr.bf16.mxu0 0
      %1199 = vmatpush2.bf16.msra.mxu0 %v1112
      %1200 = vmatprep.mubr.bf16.mxu0 %v902
      %1201 = vmatmul.mubr.bf16.gmra.mxu0 %v901
      %v1202 = vpop.f32.mrf.mxu0
      %v1203 = vadd.f32 %v974, %v1202
      %v1204 = vpop.f32.mrf.mxu0
      %v1205 = vpop.f32.mrf.mxu0
      %v1206 = vpop.f32.mrf.mxu0
      %1207 = vdwg.mxu0
      %1208 = vmatprep.subr.bf16.mxu0 0
      %1209 = vmatpush1.bf16.msra.mxu0 %v1127
      %1210 = vmatprep.subr.bf16.mxu0 0
      %1211 = vmatpush1.bf16.msra.mxu0 %v1126
      %1212 = vmatprep.subr.bf16.mxu0 0
      %1213 = vmatpush1.bf16.msra.mxu0 %v1125
      %1214 = vmatprep.subr.bf16.mxu0 0
      %1215 = vmatpush1.bf16.msra.mxu0 %v1124
      %1216 = vmatprep.subr.bf16.mxu0 0
      %1217 = vmatpush1.bf16.msra.mxu0 %v1123
      %1218 = vmatprep.subr.bf16.mxu0 0
      %1219 = vmatpush1.bf16.msra.mxu0 %v1122
      %1220 = vmatprep.subr.bf16.mxu0 0
      %1221 = vmatpush1.bf16.msra.mxu0 %v1121
      %1222 = vmatprep.subr.bf16.mxu0 0
      %1223 = vmatpush1.bf16.msra.mxu0 %v1120
      %1224 = vmatprep.subr.bf16.mxu0 0
      %1225 = vmatpush2.bf16.msra.mxu0 %v1135
      %1226 = vmatprep.subr.bf16.mxu0 0
      %1227 = vmatpush2.bf16.msra.mxu0 %v1134
      %1228 = vmatprep.subr.bf16.mxu0 0
      %1229 = vmatpush2.bf16.msra.mxu0 %v1133
      %1230 = vmatprep.subr.bf16.mxu0 0
      %1231 = vmatpush2.bf16.msra.mxu0 %v1132
      %1232 = vmatprep.subr.bf16.mxu0 0
      %1233 = vmatpush2.bf16.msra.mxu0 %v1131
      %1234 = vmatprep.subr.bf16.mxu0 0
      %1235 = vmatpush2.bf16.msra.mxu0 %v1130
      %1236 = vmatprep.subr.bf16.mxu0 0
      %1237 = vmatpush2.bf16.msra.mxu0 %v1129
      %1238 = vmatprep.subr.bf16.mxu0 0
      %1239 = vmatpush2.bf16.msra.mxu0 %v1128
      %1240 = vmatprep.mubr.bf16.mxu0 %v904
      %1241 = vmatmul.mubr.bf16.gmra.mxu0 %v903
      %v1242 = vpop.f32.mrf.mxu0
      %v1243 = vadd.f32 %v1203, %v1242
      %v1244 = vpop.f32.mrf.mxu0
      %v1245 = vpop.f32.mrf.mxu0
      %v1246 = vpop.f32.mrf.mxu0
      %1247 = vdwg.mxu0
      %1248 = vst [vmem:[#allocation12] sm:$0xff] %v1243
    $region49: #{tpu_custom_call.1} parent=1 // pred_fallthru
      _
    // Predicated region
    $region50: #{tpu_custom_call.1} parent=1 // pred_check
      _
    $region51: #{tpu_custom_call.1} parent=1 // pred_check_branch
      %1250 = sbr.rel (0) target = $region53
    $region52: #{tpu_custom_call.1} parent=1 // pred_region
      %s1252 = ssub.s32 128, 128
      %1253 = vsyncadd [#allocation6], %s1252
      %s1255 = sshll.u32 [#allocation12], 4
      %s1256 = int_to_ptr.vmem [resolvable:$true] %s1255
      %1258 = dma.vmem_to_hbm [thread:$0]  %s1256, 128, %s6, [#allocation6]
    $region53: #{tpu_custom_call.1} parent=1 // pred_fallthru
      _
    // Predicated region
    $region54: #{tpu_custom_call.1} parent=1 // pred_check
      _
    $region55: #{tpu_custom_call.1} parent=1 // pred_check_branch
      %1260 = sbr.rel (0) target = $region57
    $region56: #{tpu_custom_call.1} parent=1 // pred_region
      %1261 = dma.done [#allocation6], 128
    $region57: #{tpu_custom_call.1} parent=1 // pred_fallthru
      _
    %1262 = vsyncpa [#allocation5], 1
    %1263 = vsyncpa [#allocation8], 1
    %1264 = vsyncpa [#allocation11], 1
    %1265 = vsyncpa [#allocation6], 1

// kernel: tpu_custom_call.1
$region0: #{tpu_custom_call.1}
  #allocation0 [shape = 'u32[]', space=smem, size = 0x4, offset = 0x4, fixed_abs, tag = 'smem constant byte address 0x4 - core index']
  #allocation1 [shape = 'u32[144,128]{1,0:T(1,128)}', space=vmem, size = 0x12000, scoped, tag = 'internal scratch']
  #allocation2 [shape = 'f32[8,4,128]{2,1,0:T(4,128)}', space=vmem, size = 0x4000, scoped, tag = 'scratch operand']
  #allocation3 [shape = 'f32[8,4,128]{2,1,0:T(4,128)}', space=vmem, size = 0x4000, scoped, tag = 'scratch operand']
  %s0 = inlined_call_operand.hbm [shape: f32[8,4,256], index: 0, kind: input, shape index: {}]
  %s1 = inlined_call_operand.hbm [shape: bf16[4,512], index: 1, kind: input, shape index: {}]
  %s2 = inlined_call_operand.hbm [shape: bf16[4,512], index: 2, kind: input, shape index: {}]
  %s3 = inlined_call_operand.vmem [shape: f32[1,512], index: 3, kind: input, shape index: {}]
  %s4 = inlined_call_operand.hbm [shape: bf16[512,128], index: 4, kind: input, shape index: {}]
  %s5 = inlined_call_operand.vmem [shape: f32[1,128], index: 5, kind: input, shape index: {}]
  %s6 = inlined_call_operand.hbm [shape: f32[8,128], index: 6, kind: output, shape index: {}]
  %s7 = sld [smem:[#allocation0]]
  $region58: #{tpu_custom_call.1} parent=0
    _
  %s9 = ssub.s32 1, %s7
  %s10 = scalar_select 0, %s9, %s7
  $region1: #{tpu_custom_call.1} parent=0
    #allocation4 [shape = 'u8[32768]{0}', space=vmem, size = 0x8000, scoped, tag = 'input window, operand 0, single buffered']
    #allocation5 [shape = 's32[1]{0}', space=sflag, size = 0x4, scoped, tag = 'scoped memory for tpu_custom_call.1']
    #allocation6 [shape = 's32[1]{0}', space=sflag, size = 0x4, scoped, tag = 'scoped memory for tpu_custom_call.1']
    #allocation7 [shape = 'u8[4096]{0}', space=vmem, size = 0x1000, scoped, tag = 'input window, operand 1, single buffered']
    #allocation8 [shape = 's32[1]{0}', space=sflag, size = 0x4, scoped, tag = 'scoped memory for tpu_custom_call.1']
    #allocation9 [shape = 'u8[4096]{0}', space=vmem, size = 0x1000, scoped, tag = 'input window, operand 2, single buffered']
    #allocation10 [shape = 'u8[131072]{0}', space=vmem, size = 0x20000, scoped, tag = 'input window, operand 4, single buffered']
    #allocation11 [shape = 's32[1]{0}', space=sflag, size = 0x4, scoped, tag = 'scoped memory for tpu_custom_call.1']
    #allocation12 [shape = 'u8[4096]{0}', space=vmem, size = 0x1000, scoped, tag = 'output window, operand 0, single buffered']
    %11 = vsyncpa [#allocation5], 0
    %12 = vsyncpa [#allocation8], 0
    %13 = vsyncpa [#allocation11], 0
    %14 = vsyncpa [#allocation6], 0
    // Predicated region
    $region2: #{tpu_custom_call.1} parent=1 // pred_check
      _
    $region3: #{tpu_custom_call.1} parent=1 // pred_check_branch
      %16 = sbr.rel (0) target = $region5
    $region4: #{tpu_custom_call.1} parent=1 // pred_region
      %s18 = ssub.s32 1024, 1024
      %19 = vsyncadd [#allocation5], %s18
      %s20 = sshll.u32 [#allocation4], 4
      %s21 = int_to_ptr.vmem [resolvable:$true] %s20
      %26 = dma.hbm_to_vmem [thread:$0]  %s0, 1024, %s21, [#allocation5], 128, 128, 8
    $region5: #{tpu_custom_call.1} parent=1 // pred_fallthru
      _
    // Predicated region
    $region6: #{tpu_custom_call.1} parent=1 // pred_check
      _
    $region7: #{tpu_custom_call.1} parent=1 // pred_check_branch
      %28 = sbr.rel (0) target = $region9
    $region8: #{tpu_custom_call.1} parent=1 // pred_region
      %s30 = ssub.s32 128, 128
      %31 = vsyncadd [#allocation8], %s30
      %s33 = sshll.u32 [#allocation7], 4
      %s34 = int_to_ptr.vmem [resolvable:$true] %s33
      %36 = dma.hbm_to_vmem [thread:$0]  %s1, 128, %s34, [#allocation8]
    $region9: #{tpu_custom_call.1} parent=1 // pred_fallthru
      _
    // Predicated region
    $region10: #{tpu_custom_call.1} parent=1 // pred_check
      _
    $region11: #{tpu_custom_call.1} parent=1 // pred_check_branch
      %38 = sbr.rel (0) target = $region13
    $region12: #{tpu_custom_call.1} parent=1 // pred_region
      %s40 = ssub.s32 128, 128
      %41 = vsyncadd [#allocation8], %s40
      %s43 = sshll.u32 [#allocation9], 4
      %s44 = int_to_ptr.vmem [resolvable:$true] %s43
      %46 = dma.hbm_to_vmem [thread:$0]  %s2, 128, %s44, [#allocation8]
    $region13: #{tpu_custom_call.1} parent=1 // pred_fallthru
      _
    // Predicated region
    $region14: #{tpu_custom_call.1} parent=1 // pred_check
      _
    $region15: #{tpu_custom_call.1} parent=1 // pred_check_branch
      %48 = sbr.rel (0) target = $region17
    $region16: #{tpu_custom_call.1} parent=1 // pred_region
      _
    $region17: #{tpu_custom_call.1} parent=1 // pred_fallthru
      _
    // Predicated region
    $region18: #{tpu_custom_call.1} parent=1 // pred_check
      _
    $region19: #{tpu_custom_call.1} parent=1 // pred_check_branch
      %50 = sbr.rel (0) target = $region21
    $region20: #{tpu_custom_call.1} parent=1 // pred_region
      %s52 = ssub.s32 4096, 4096
      %53 = vsyncadd [#allocation11], %s52
      %s54 = sshll.u32 [#allocation10], 4
      %s55 = int_to_ptr.vmem [resolvable:$true] %s54
      %60 = dma.hbm_to_vmem [thread:$0]  %s4, 4096, %s55, [#allocation11], 64, 64, 4
    $region21: #{tpu_custom_call.1} parent=1 // pred_fallthru
      _
    // Predicated region
    $region22: #{tpu_custom_call.1} parent=1 // pred_check
      _
    $region23: #{tpu_custom_call.1} parent=1 // pred_check_branch
      %62 = sbr.rel (0) target = $region25
    $region24: #{tpu_custom_call.1} parent=1 // pred_region
      _
    $region25: #{tpu_custom_call.1} parent=1 // pred_fallthru
      _
    // Predicated region
    $region26: #{tpu_custom_call.1} parent=1 // pred_check
      _
    $region27: #{tpu_custom_call.1} parent=1 // pred_check_branch
      %64 = sbr.rel (0) target = $region29
    $region28: #{tpu_custom_call.1} parent=1 // pred_region
      %65 = dma.done [#allocation5], 1024
    $region29: #{tpu_custom_call.1} parent=1 // pred_fallthru
      _
    // Predicated region
    $region30: #{tpu_custom_call.1} parent=1 // pred_check
      _
    $region31: #{tpu_custom_call.1} parent=1 // pred_check_branch
      %67 = sbr.rel (0) target = $region33
    $region32: #{tpu_custom_call.1} parent=1 // pred_region
      %68 = dma.done [#allocation8], 128
    $region33: #{tpu_custom_call.1} parent=1 // pred_fallthru
      _
    // Predicated region
    $region34: #{tpu_custom_call.1} parent=1 // pred_check
      _
    $region35: #{tpu_custom_call.1} parent=1 // pred_check_branch
      %70 = sbr.rel (0) target = $region37
    $region36: #{tpu_custom_call.1} parent=1 // pred_region
      %71 = dma.done [#allocation8], 128
    $region37: #{tpu_custom_call.1} parent=1 // pred_fallthru
      _
    // Predicated region
    $region38: #{tpu_custom_call.1} parent=1 // pred_check
      _
    $region39: #{tpu_custom_call.1} parent=1 // pred_check_branch
      %73 = sbr.rel (0) target = $region41
    $region40: #{tpu_custom_call.1} parent=1 // pred_region
      %74 = dma.done [#allocation11], 4096
    $region41: #{tpu_custom_call.1} parent=1 // pred_fallthru
      _
    %p76 = scmp.eq.s32.totalorder 0, 0
    // Predicated region
    $region42: #{tpu_custom_call.1} parent=1 // pred_check
      %p77 = pneg %p76
    $region43: #{tpu_custom_call.1} parent=1 // pred_check_branch
      %79 = sbr.rel (%p77) target = $region45
    $region44: #{tpu_custom_call.1} parent=1 // pred_region
      %80 = vst [vmem:[#allocation2] sm:$0xf] -3.4028235e+38
      %81 = vst [vmem:[#allocation2 + $0x4] sm:$0xf] -3.4028235e+38
      %82 = vst [vmem:[#allocation2 + $0x8] sm:$0xf] -3.4028235e+38
      %83 = vst [vmem:[#allocation2 + $0xc] sm:$0xf] -3.4028235e+38
      %84 = vst [vmem:[#allocation2 + $0x10] sm:$0xf] -3.4028235e+38
      %85 = vst [vmem:[#allocation2 + $0x14] sm:$0xf] -3.4028235e+38
      %86 = vst [vmem:[#allocation2 + $0x18] sm:$0xf] -3.4028235e+38
      %87 = vst [vmem:[#allocation2 + $0x1c] sm:$0xf] -3.4028235e+38
      %88 = vst [vmem:[#allocation3] sm:$0xf] 0.0
      %89 = vst [vmem:[#allocation3 + $0x4] sm:$0xf] 0.0
      %90 = vst [vmem:[#allocation3 + $0x8] sm:$0xf] 0.0
      %91 = vst [vmem:[#allocation3 + $0xc] sm:$0xf] 0.0
      %92 = vst [vmem:[#allocation3 + $0x10] sm:$0xf] 0.0
      %93 = vst [vmem:[#allocation3 + $0x14] sm:$0xf] 0.0
      %94 = vst [vmem:[#allocation3 + $0x18] sm:$0xf] 0.0
      %95 = vst [vmem:[#allocation3 + $0x1c] sm:$0xf] 0.0
    $region45: #{tpu_custom_call.1} parent=1 // pred_fallthru
      _
    %v96 = vld [vmem:[#allocation4] sm:$0xf]
    %v97 = vld [vmem:[#allocation4 + $0x8] sm:$0xf]
    %v98 = vld [vmem:[#allocation4 + $0x10] sm:$0xf]
    %v99 = vld [vmem:[#allocation4 + $0x18] sm:$0xf]
    %v100 = vld [vmem:[#allocation4 + $0x20] sm:$0xf]
    %v101 = vld [vmem:[#allocation4 + $0x28] sm:$0xf]
    %v102 = vld [vmem:[#allocation4 + $0x30] sm:$0xf]
    %v103 = vld [vmem:[#allocation4 + $0x38] sm:$0xf]
    %v104 = vld [vmem:[#allocation2] sm:$0xf]
    %v105 = vld [vmem:[#allocation2 + $0x4] sm:$0xf]
    %v106 = vld [vmem:[#allocation2 + $0x8] sm:$0xf]
    %v107 = vld [vmem:[#allocation2 + $0xc] sm:$0xf]
    %v108 = vld [vmem:[#allocation2 + $0x10] sm:$0xf]
    %v109 = vld [vmem:[#allocation2 + $0x14] sm:$0xf]
    %v110 = vld [vmem:[#allocation2 + $0x18] sm:$0xf]
    %v111 = vld [vmem:[#allocation2 + $0x1c] sm:$0xf]
    %v112 = vmax.f32 %v104, %v96
    %v113 = vmax.f32 %v105, %v97
    %v114 = vmax.f32 %v106, %v98
    %v115 = vmax.f32 %v107, %v99
    %v116 = vmax.f32 %v108, %v100
    %v117 = vmax.f32 %v109, %v101
    %v118 = vmax.f32 %v110, %v102
    %v119 = vmax.f32 %v111, %v103
    %120 = vst [vmem:[#allocation2] sm:$0xf] %v112
    %121 = vst [vmem:[#allocation2 + $0x4] sm:$0xf] %v113
    %122 = vst [vmem:[#allocation2 + $0x8] sm:$0xf] %v114
    %123 = vst [vmem:[#allocation2 + $0xc] sm:$0xf] %v115
    %124 = vst [vmem:[#allocation2 + $0x10] sm:$0xf] %v116
    %125 = vst [vmem:[#allocation2 + $0x14] sm:$0xf] %v117
    %126 = vst [vmem:[#allocation2 + $0x18] sm:$0xf] %v118
    %127 = vst [vmem:[#allocation2 + $0x1c] sm:$0xf] %v119
    %v128 = vld [vmem:[#allocation3] sm:$0xf]
    %v129 = vld [vmem:[#allocation3 + $0x4] sm:$0xf]
    %v130 = vld [vmem:[#allocation3 + $0x8] sm:$0xf]
    %v131 = vld [vmem:[#allocation3 + $0xc] sm:$0xf]
    %v132 = vld [vmem:[#allocation3 + $0x10] sm:$0xf]
    %v133 = vld [vmem:[#allocation3 + $0x14] sm:$0xf]
    %v134 = vld [vmem:[#allocation3 + $0x18] sm:$0xf]
    %v135 = vld [vmem:[#allocation3 + $0x1c] sm:$0xf]
    %v136 = vadd.f32 %v128, %v96
    %v137 = vadd.f32 %v129, %v97
    %v138 = vadd.f32 %v130, %v98
    %v139 = vadd.f32 %v131, %v99
    %v140 = vadd.f32 %v132, %v100
    %v141 = vadd.f32 %v133, %v101
    %v142 = vadd.f32 %v134, %v102
    %v143 = vadd.f32 %v135, %v103
    %144 = vst [vmem:[#allocation3] sm:$0xf] %v136
    %145 = vst [vmem:[#allocation3 + $0x4] sm:$0xf] %v137
    %146 = vst [vmem:[#allocation3 + $0x8] sm:$0xf] %v138
    %147 = vst [vmem:[#allocation3 + $0xc] sm:$0xf] %v139
    %148 = vst [vmem:[#allocation3 + $0x10] sm:$0xf] %v140
    %149 = vst [vmem:[#allocation3 + $0x14] sm:$0xf] %v141
    %150 = vst [vmem:[#allocation3 + $0x18] sm:$0xf] %v142
    %151 = vst [vmem:[#allocation3 + $0x1c] sm:$0xf] %v143
    %v152 = vld [vmem:[#allocation4 + $0x4] sm:$0xf]
    %v153 = vld [vmem:[#allocation4 + $0xc] sm:$0xf]
    %v154 = vld [vmem:[#allocation4 + $0x14] sm:$0xf]
    %v155 = vld [vmem:[#allocation4 + $0x1c] sm:$0xf]
    %v156 = vld [vmem:[#allocation4 + $0x24] sm:$0xf]
    %v157 = vld [vmem:[#allocation4 + $0x2c] sm:$0xf]
    %v158 = vld [vmem:[#allocation4 + $0x34] sm:$0xf]
    %v159 = vld [vmem:[#allocation4 + $0x3c] sm:$0xf]
    %v160 = vld [vmem:[#allocation2] sm:$0xf]
    %v161 = vld [vmem:[#allocation2 + $0x4] sm:$0xf]
    %v162 = vld [vmem:[#allocation2 + $0x8] sm:$0xf]
    %v163 = vld [vmem:[#allocation2 + $0xc] sm:$0xf]
    %v164 = vld [vmem:[#allocation2 + $0x10] sm:$0xf]
    %v165 = vld [vmem:[#allocation2 + $0x14] sm:$0xf]
    %v166 = vld [vmem:[#allocation2 + $0x18] sm:$0xf]
    %v167 = vld [vmem:[#allocation2 + $0x1c] sm:$0xf]
    %v168 = vmax.f32 %v160, %v152
    %v169 = vmax.f32 %v161, %v153
    %v170 = vmax.f32 %v162, %v154
    %v171 = vmax.f32 %v163, %v155
    %v172 = vmax.f32 %v164, %v156
    %v173 = vmax.f32 %v165, %v157
    %v174 = vmax.f32 %v166, %v158
    %v175 = vmax.f32 %v167, %v159
    %176 = vst [vmem:[#allocation2] sm:$0xf] %v168
    %177 = vst [vmem:[#allocation2 + $0x4] sm:$0xf] %v169
    %178 = vst [vmem:[#allocation2 + $0x8] sm:$0xf] %v170
    %179 = vst [vmem:[#allocation2 + $0xc] sm:$0xf] %v171
    %180 = vst [vmem:[#allocation2 + $0x10] sm:$0xf] %v172
    %181 = vst [vmem:[#allocation2 + $0x14] sm:$0xf] %v173
    %182 = vst [vmem:[#allocation2 + $0x18] sm:$0xf] %v174
    %183 = vst [vmem:[#allocation2 + $0x1c] sm:$0xf] %v175
    %v184 = vld [vmem:[#allocation3] sm:$0xf]
    %v185 = vld [vmem:[#allocation3 + $0x4] sm:$0xf]
    %v186 = vld [vmem:[#allocation3 + $0x8] sm:$0xf]
    %v187 = vld [vmem:[#allocation3 + $0xc] sm:$0xf]
    %v188 = vld [vmem:[#allocation3 + $0x10] sm:$0xf]
    %v189 = vld [vmem:[#allocation3 + $0x14] sm:$0xf]
    %v190 = vld [vmem:[#allocation3 + $0x18] sm:$0xf]
    %v191 = vld [vmem:[#allocation3 + $0x1c] sm:$0xf]
    %v192 = vadd.f32 %v184, %v152
    %v193 = vadd.f32 %v185, %v153
    %v194 = vadd.f32 %v186, %v154
    %v195 = vadd.f32 %v187, %v155
    %v196 = vadd.f32 %v188, %v156
    %v197 = vadd.f32 %v189, %v157
    %v198 = vadd.f32 %v190, %v158
    %v199 = vadd.f32 %v191, %v159
    %200 = vst [vmem:[#allocation3] sm:$0xf] %v192
    %201 = vst [vmem:[#allocation3 + $0x4] sm:$0xf] %v193
    %202 = vst [vmem:[#allocation3 + $0x8] sm:$0xf] %v194
    %203 = vst [vmem:[#allocation3 + $0xc] sm:$0xf] %v195
    %204 = vst [vmem:[#allocation3 + $0x10] sm:$0xf] %v196
    %205 = vst [vmem:[#allocation3 + $0x14] sm:$0xf] %v197
    %206 = vst [vmem:[#allocation3 + $0x18] sm:$0xf] %v198
    %207 = vst [vmem:[#allocation3 + $0x1c] sm:$0xf] %v199
    // Predicated region
    $region46: #{tpu_custom_call.1} parent=1 // pred_check
      %p208 = pneg %p76
    $region47: #{tpu_custom_call.1} parent=1 // pred_check_branch
      %210 = sbr.rel (%p208) target = $region49
    $region48: #{tpu_custom_call.1} parent=1 // pred_region
      %v211 = vld [vmem:[#allocation2] sm:$0xf]
      %v212 = vld [vmem:[#allocation2 + $0x4] sm:$0xf]
      %v213 = vld [vmem:[#allocation2 + $0x8] sm:$0xf]
      %v214 = vld [vmem:[#allocation2 + $0xc] sm:$0xf]
      %v215 = vld [vmem:[#allocation2 + $0x10] sm:$0xf]
      %v216 = vld [vmem:[#allocation2 + $0x14] sm:$0xf]
      %v217 = vld [vmem:[#allocation2 + $0x18] sm:$0xf]
      %v218 = vld [vmem:[#allocation2 + $0x1c] sm:$0xf]
      %vm219 = vcmask 1043456
      %v220 = vsel %vm219, %v211, -inf
      %221 = vmax.xlane.f32.xlu0 %v220
      %v222 = vpop.xlane.xlu0 %221
      %v223 = vsel %vm219, %v212, -inf
      %224 = vmax.xlane.f32.xlu0 %v223
      %v225 = vpop.xlane.xlu0 %224
      %v226 = vsel %vm219, %v213, -inf
      %227 = vmax.xlane.f32.xlu0 %v226
      %v228 = vpop.xlane.xlu0 %227
      %v229 = vsel %vm219, %v214, -inf
      %230 = vmax.xlane.f32.xlu0 %v229
      %v231 = vpop.xlane.xlu0 %230
      %v232 = vsel %vm219, %v215, -inf
      %233 = vmax.xlane.f32.xlu0 %v232
      %v234 = vpop.xlane.xlu0 %233
      %v235 = vsel %vm219, %v216, -inf
      %236 = vmax.xlane.f32.xlu0 %v235
      %v237 = vpop.xlane.xlu0 %236
      %v238 = vsel %vm219, %v217, -inf
      %239 = vmax.xlane.f32.xlu0 %v238
      %v240 = vpop.xlane.xlu0 %239
      %v241 = vsel %vm219, %v218, -inf
      %242 = vmax.xlane.f32.xlu0 %v241
      %v243 = vpop.xlane.xlu0 %242
      %v244 = vmin.f32 %v222, 20.0
      %v245 = vmin.f32 %v225, 20.0
      %v246 = vmin.f32 %v228, 20.0
      %v247 = vmin.f32 %v231, 20.0
      %v248 = vmin.f32 %v234, 20.0
      %v249 = vmin.f32 %v237, 20.0
      %v250 = vmin.f32 %v240, 20.0
      %v251 = vmin.f32 %v243, 20.0
      %v252 = vmul.f32 %v244, 1.442695
      %v253 = vpow.pop %v252
      %v254 = vmul.f32 %v245, 1.442695
      %v255 = vpow.pop %v254
      %v256 = vmul.f32 %v246, 1.442695
      %v257 = vpow.pop %v256
      %v258 = vmul.f32 %v247, 1.442695
      %v259 = vpow.pop %v258
      %v260 = vmul.f32 %v248, 1.442695
      %v261 = vpow.pop %v260
      %v262 = vmul.f32 %v249, 1.442695
      %v263 = vpow.pop %v262
      %v264 = vmul.f32 %v250, 1.442695
      %v265 = vpow.pop %v264
      %v266 = vmul.f32 %v251, 1.442695
      %v267 = vpow.pop %v266
      %v268 = vadd.f32 %v253, 2.0
      %v269 = vadd.f32 %v255, 2.0
      %v270 = vadd.f32 %v257, 2.0
      %v271 = vadd.f32 %v259, 2.0
      %v272 = vadd.f32 %v261, 2.0
      %v273 = vadd.f32 %v263, 2.0
      %v274 = vadd.f32 %v265, 2.0
      %v275 = vadd.f32 %v267, 2.0
      %v276 = vmul.f32 %v253, %v268
      %v277 = vmul.f32 %v255, %v269
      %v278 = vmul.f32 %v257, %v270
      %v279 = vmul.f32 %v259, %v271
      %v280 = vmul.f32 %v261, %v272
      %v281 = vmul.f32 %v263, %v273
      %v282 = vmul.f32 %v265, %v274
      %v283 = vmul.f32 %v267, %v275
      %v284 = vadd.f32 %v276, 2.0
      %v285 = vadd.f32 %v277, 2.0
      %v286 = vadd.f32 %v278, 2.0
      %v287 = vadd.f32 %v279, 2.0
      %v288 = vadd.f32 %v280, 2.0
      %v289 = vadd.f32 %v281, 2.0
      %v290 = vadd.f32 %v282, 2.0
      %v291 = vadd.f32 %v283, 2.0
      %v292 = vrcp.pop %v284
      %v293 = vrcp.pop %v285
      %v294 = vrcp.pop %v286
      %v295 = vrcp.pop %v287
      %v296 = vrcp.pop %v288
      %v297 = vrcp.pop %v289
      %v298 = vrcp.pop %v290
      %v299 = vrcp.pop %v291
      %v300 = vmul.f32 %v276, %v292
      %v301 = vmul.f32 %v277, %v293
      %v302 = vmul.f32 %v278, %v294
      %v303 = vmul.f32 %v279, %v295
      %v304 = vmul.f32 %v280, %v296
      %v305 = vmul.f32 %v281, %v297
      %v306 = vmul.f32 %v282, %v298
      %v307 = vmul.f32 %v283, %v299
      %vm308 = vcmp.gt.f32.partialorder %v222, 20.0
      %vm309 = vcmp.gt.f32.partialorder %v225, 20.0
      %vm310 = vcmp.gt.f32.partialorder %v228, 20.0
      %vm311 = vcmp.gt.f32.partialorder %v231, 20.0
      %vm312 = vcmp.gt.f32.partialorder %v234, 20.0
      %vm313 = vcmp.gt.f32.partialorder %v237, 20.0
      %vm314 = vcmp.gt.f32.partialorder %v240, 20.0
      %vm315 = vcmp.gt.f32.partialorder %v243, 20.0
      %v316 = vsel %vm308, 1.0, %v300
      %v317 = vsel %vm309, 1.0, %v301
      %v318 = vsel %vm310, 1.0, %v302
      %v319 = vsel %vm311, 1.0, %v303
      %v320 = vsel %vm312, 1.0, %v304
      %v321 = vsel %vm313, 1.0, %v305
      %v322 = vsel %vm314, 1.0, %v306
      %v323 = vsel %vm315, 1.0, %v307
      %v324 = vmul.f32 %v222, %v316
      %v325 = vmul.f32 %v225, %v317
      %v326 = vmul.f32 %v228, %v318
      %v327 = vmul.f32 %v231, %v319
      %v328 = vmul.f32 %v234, %v320
      %v329 = vmul.f32 %v237, %v321
      %v330 = vmul.f32 %v240, %v322
      %v331 = vmul.f32 %v243, %v323
      %v332 = vld [vmem:[#allocation3] sm:$0xf]
      %v333 = vld [vmem:[#allocation3 + $0x4] sm:$0xf]
      %v334 = vld [vmem:[#allocation3 + $0x8] sm:$0xf]
      %v335 = vld [vmem:[#allocation3 + $0xc] sm:$0xf]
      %v336 = vld [vmem:[#allocation3 + $0x10] sm:$0xf]
      %v337 = vld [vmem:[#allocation3 + $0x14] sm:$0xf]
      %v338 = vld [vmem:[#allocation3 + $0x18] sm:$0xf]
      %v339 = vld [vmem:[#allocation3 + $0x1c] sm:$0xf]
      %v340 = vsel %vm219, %v332, 0.0
      %341 = vadd.xlane.f32.xlu0 %v340
      %v342 = vpop.xlane.xlu0 %341
      %v343 = vsel %vm219, %v333, 0.0
      %344 = vadd.xlane.f32.xlu0 %v343
      %v345 = vpop.xlane.xlu0 %344
      %v346 = vsel %vm219, %v334, 0.0
      %347 = vadd.xlane.f32.xlu0 %v346
      %v348 = vpop.xlane.xlu0 %347
      %v349 = vsel %vm219, %v335, 0.0
      %350 = vadd.xlane.f32.xlu0 %v349
      %v351 = vpop.xlane.xlu0 %350
      %v352 = vsel %vm219, %v336, 0.0
      %353 = vadd.xlane.f32.xlu0 %v352
      %v354 = vpop.xlane.xlu0 %353
      %v355 = vsel %vm219, %v337, 0.0
      %356 = vadd.xlane.f32.xlu0 %v355
      %v357 = vpop.xlane.xlu0 %356
      %v358 = vsel %vm219, %v338, 0.0
      %359 = vadd.xlane.f32.xlu0 %v358
      %v360 = vpop.xlane.xlu0 %359
      %v361 = vsel %vm219, %v339, 0.0
      %362 = vadd.xlane.f32.xlu0 %v361
      %v363 = vpop.xlane.xlu0 %362
      %v364 = vmul.f32 %v342, 0.00390625
      %v365 = vmul.f32 %v345, 0.00390625
      %v366 = vmul.f32 %v348, 0.00390625
      %v367 = vmul.f32 %v351, 0.00390625
      %v368 = vmul.f32 %v354, 0.00390625
      %v369 = vmul.f32 %v357, 0.00390625
      %v370 = vmul.f32 %v360, 0.00390625
      %v371 = vmul.f32 %v363, 0.00390625
      %v372 = vmin.f32 %v364, 20.0
      %v373 = vmin.f32 %v365, 20.0
      %v374 = vmin.f32 %v366, 20.0
      %v375 = vmin.f32 %v367, 20.0
      %v376 = vmin.f32 %v368, 20.0
      %v377 = vmin.f32 %v369, 20.0
      %v378 = vmin.f32 %v370, 20.0
      %v379 = vmin.f32 %v371, 20.0
      %v380 = vmul.f32 %v372, 1.442695
      %v381 = vpow.pop %v380
      %v382 = vmul.f32 %v373, 1.442695
      %v383 = vpow.pop %v382
      %v384 = vmul.f32 %v374, 1.442695
      %v385 = vpow.pop %v384
      %v386 = vmul.f32 %v375, 1.442695
      %v387 = vpow.pop %v386
      %v388 = vmul.f32 %v376, 1.442695
      %v389 = vpow.pop %v388
      %v390 = vmul.f32 %v377, 1.442695
      %v391 = vpow.pop %v390
      %v392 = vmul.f32 %v378, 1.442695
      %v393 = vpow.pop %v392
      %v394 = vmul.f32 %v379, 1.442695
      %v395 = vpow.pop %v394
      %v396 = vadd.f32 %v381, 2.0
      %v397 = vadd.f32 %v383, 2.0
      %v398 = vadd.f32 %v385, 2.0
      %v399 = vadd.f32 %v387, 2.0
      %v400 = vadd.f32 %v389, 2.0
      %v401 = vadd.f32 %v391, 2.0
      %v402 = vadd.f32 %v393, 2.0
      %v403 = vadd.f32 %v395, 2.0
      %v404 = vmul.f32 %v381, %v396
      %v405 = vmul.f32 %v383, %v397
      %v406 = vmul.f32 %v385, %v398
      %v407 = vmul.f32 %v387, %v399
      %v408 = vmul.f32 %v389, %v400
      %v409 = vmul.f32 %v391, %v401
      %v410 = vmul.f32 %v393, %v402
      %v411 = vmul.f32 %v395, %v403
      %v412 = vadd.f32 %v404, 2.0
      %v413 = vadd.f32 %v405, 2.0
      %v414 = vadd.f32 %v406, 2.0
      %v415 = vadd.f32 %v407, 2.0
      %v416 = vadd.f32 %v408, 2.0
      %v417 = vadd.f32 %v409, 2.0
      %v418 = vadd.f32 %v410, 2.0
      %v419 = vadd.f32 %v411, 2.0
      %v420 = vrcp.pop %v412
      %v421 = vrcp.pop %v413
      %v422 = vrcp.pop %v414
      %v423 = vrcp.pop %v415
      %v424 = vrcp.pop %v416
      %v425 = vrcp.pop %v417
      %v426 = vrcp.pop %v418
      %v427 = vrcp.pop %v419
      %v428 = vmul.f32 %v404, %v420
      %v429 = vmul.f32 %v405, %v421
      %v430 = vmul.f32 %v406, %v422
      %v431 = vmul.f32 %v407, %v423
      %v432 = vmul.f32 %v408, %v424
      %v433 = vmul.f32 %v409, %v425
      %v434 = vmul.f32 %v410, %v426
      %v435 = vmul.f32 %v411, %v427
      %vm436 = vcmp.gt.f32.partialorder %v364, 20.0
      %vm437 = vcmp.gt.f32.partialorder %v365, 20.0
      %vm438 = vcmp.gt.f32.partialorder %v366, 20.0
      %vm439 = vcmp.gt.f32.partialorder %v367, 20.0
      %vm440 = vcmp.gt.f32.partialorder %v368, 20.0
      %vm441 = vcmp.gt.f32.partialorder %v369, 20.0
      %vm442 = vcmp.gt.f32.partialorder %v370, 20.0
      %vm443 = vcmp.gt.f32.partialorder %v371, 20.0
      %v444 = vsel %vm436, 1.0, %v428
      %v445 = vsel %vm437, 1.0, %v429
      %v446 = vsel %vm438, 1.0, %v430
      %v447 = vsel %vm439, 1.0, %v431
      %v448 = vsel %vm440, 1.0, %v432
      %v449 = vsel %vm441, 1.0, %v433
      %v450 = vsel %vm442, 1.0, %v434
      %v451 = vsel %vm443, 1.0, %v435
      %v452 = vmul.f32 %v364, %v444
      %v453 = vmul.f32 %v365, %v445
      %v454 = vmul.f32 %v366, %v446
      %v455 = vmul.f32 %v367, %v447
      %v456 = vmul.f32 %v368, %v448
      %v457 = vmul.f32 %v369, %v449
      %v458 = vmul.f32 %v370, %v450
      %v459 = vmul.f32 %v371, %v451
      %v460 = vpack.c.bf16 %v324, %v324
      %v461 = vpack.c.bf16 %v325, %v325
      %v462 = vpack.c.bf16 %v326, %v326
      %v463 = vpack.c.bf16 %v327, %v327
      %v464 = vpack.c.bf16 %v328, %v328
      %v465 = vpack.c.bf16 %v329, %v329
      %v466 = vpack.c.bf16 %v330, %v330
      %v467 = vpack.c.bf16 %v331, %v331
      %v468 = vld [vmem:[#allocation7] sm:$0xff]
      %v469 = vpack.c.bf16 %v452, %v452
      %v470 = vpack.c.bf16 %v453, %v453
      %v471 = vpack.c.bf16 %v454, %v454
      %v472 = vpack.c.bf16 %v455, %v455
      %v473 = vpack.c.bf16 %v456, %v456
      %v474 = vpack.c.bf16 %v457, %v457
      %v475 = vpack.c.bf16 %v458, %v458
      %v476 = vpack.c.bf16 %v459, %v459
      %v477 = vld [vmem:[#allocation9] sm:$0xff]
      %v486 = vunpack.c.l.b16 %v469
      %v487 = vunpack.c.l.b16 %v470
      %v488 = vunpack.c.l.b16 %v471
      %v489 = vunpack.c.l.b16 %v472
      %v490 = vunpack.c.l.b16 %v473
      %v491 = vunpack.c.l.b16 %v474
      %v492 = vunpack.c.l.b16 %v475
      %v493 = vunpack.c.l.b16 %v476
      %v494 = vlaneseq
      %v495 = vand.u32 %v494, 127
      %v496 = vlaneseq
      %v497 = vshrl.u32 %v496, 7
      %v498 = vsub.s32 %v495, %v497
      %v499 = vrot.slane %v486, %v498
      %v500 = vlaneseq
      %v501 = vshrl.u32 %v500, 7
      %v502 = vsub.s32 %v495, %v501
      %v503 = vrot.slane %v487, %v502
      %v504 = vlaneseq
      %v505 = vshrl.u32 %v504, 7
      %v506 = vsub.s32 %v495, %v505
      %v507 = vrot.slane %v488, %v506
      %v508 = vlaneseq
      %v509 = vshrl.u32 %v508, 7
      %v510 = vsub.s32 %v495, %v509
      %v511 = vrot.slane %v489, %v510
      %v512 = vlaneseq
      %v513 = vshrl.u32 %v512, 7
      %v514 = vsub.s32 %v495, %v513
      %v515 = vrot.slane %v490, %v514
      %v516 = vlaneseq
      %v517 = vshrl.u32 %v516, 7
      %v518 = vsub.s32 %v495, %v517
      %v519 = vrot.slane %v491, %v518
      %v520 = vlaneseq
      %v521 = vshrl.u32 %v520, 7
      %v522 = vsub.s32 %v495, %v521
      %v523 = vrot.slane %v492, %v522
      %v524 = vlaneseq
      %v525 = vshrl.u32 %v524, 7
      %v526 = vsub.s32 %v495, %v525
      %v527 = vrot.slane %v493, %v526
      %vm528 = vcmask 1041409
      %v529 = vsel %vm528, %v503, %v499
      %vm530 = vcmask 1042434
      %v531 = vsel %vm530, %v507, %v529
      %vm532 = vcmask 1043459
      %v533 = vsel %vm532, %v511, %v531
      %vm534 = vcmask 1044484
      %v535 = vsel %vm534, %v515, %v533
      %vm536 = vcmask 1045509
      %v537 = vsel %vm536, %v519, %v535
      %vm538 = vcmask 1046534
      %v539 = vsel %vm538, %v523, %v537
      %vm540 = vcmask 1047559
      %v541 = vsel %vm540, %v527, %v539
      %v542 = vpack.c.b16 %v541, %v541
      %v544 = vcombine.high %v477, %v477
      %v546 = vunpack.c.l.s4 1983009808
      %v547 = vunpack.c.0.s8 %v546
      %v548 = vlaneseq
      %v549 = vshrl.u32 %v548, 7
      %v550 = vsub.s32 %v547, %v549
      %v551 = vrot.slane %v477, %v550
      %v553 = vunpack.c.l.s4 1983009808
      %v554 = vunpack.c.0.s8 %v553
      %v555 = vlaneseq
      %v556 = vshrl.u32 %v555, 7
      %v557 = vsub.s32 %v554, %v556
      %v558 = vrot.slane %v544, %v557
      %v559 = vcombine.high %v551, %v551
      %v560 = vcombine.high %v558, %v558
      %vm561 = vcmask 31744
      %v563 = vsel %vm561, %v542, 0
      %vm565 = vcmask 1041408
      %v567 = vsel %vm565, %v551, 0
      %v570 = vsel %vm565, %v559, 0
      %v573 = vsel %vm565, %v558, 0
      %v576 = vsel %vm565, %v560, 0
      %578 = vmatprep.subr.bf16.mxu0 0
      %579 = vmatpush1.bf16.msra.mxu0 0
      %580 = vmatprep.subr.bf16.mxu0 0
      %581 = vmatpush1.bf16.msra.mxu0 0
      %582 = vmatprep.subr.bf16.mxu0 0
      %583 = vmatpush1.bf16.msra.mxu0 0
      %584 = vmatprep.subr.bf16.mxu0 0
      %585 = vmatpush1.bf16.msra.mxu0 0
      %586 = vmatprep.subr.bf16.mxu0 0
      %587 = vmatpush1.bf16.msra.mxu0 0
      %588 = vmatprep.subr.bf16.mxu0 0
      %589 = vmatpush1.bf16.msra.mxu0 0
      %590 = vmatprep.subr.bf16.mxu0 0
      %591 = vmatpush1.bf16.msra.mxu0 0
      %592 = vmatprep.subr.bf16.mxu0 %v570
      %593 = vmatpush1.bf16.msra.mxu0 %v567
      %594 = vmatprep.subr.bf16.mxu0 0
      %595 = vmatpush2.bf16.msra.mxu0 0
      %596 = vmatprep.subr.bf16.mxu0 0
      %597 = vmatpush2.bf16.msra.mxu0 0
      %598 = vmatprep.subr.bf16.mxu0 0
      %599 = vmatpush2.bf16.msra.mxu0 0
      %600 = vmatprep.subr.bf16.mxu0 0
      %601 = vmatpush2.bf16.msra.mxu0 0
      %602 = vmatprep.subr.bf16.mxu0 0
      %603 = vmatpush2.bf16.msra.mxu0 0
      %604 = vmatprep.subr.bf16.mxu0 0
      %605 = vmatpush2.bf16.msra.mxu0 0
      %606 = vmatprep.subr.bf16.mxu0 0
      %607 = vmatpush2.bf16.msra.mxu0 0
      %608 = vmatprep.subr.bf16.mxu0 0
      %609 = vmatpush2.bf16.msra.mxu0 0
      %610 = vmatprep.mubr.bf16.mxu0 0
      %611 = vmatmul.mubr.bf16.gmra.mxu0 %v563
      %v612 = vpop.f32.mrf.mxu0
      %v613 = vadd.f32 0.0, %v612
      %v614 = vpop.f32.mrf.mxu0
      %v615 = vadd.f32 0.0, %v614
      %v616 = vpop.f32.mrf.mxu0
      %v617 = vpop.f32.mrf.mxu0
      %618 = vdwg.mxu0
      %619 = vmatprep.subr.bf16.mxu0 0
      %620 = vmatpush1.bf16.msra.mxu0 0
      %621 = vmatprep.subr.bf16.mxu0 0
      %622 = vmatpush1.bf16.msra.mxu0 0
      %623 = vmatprep.subr.bf16.mxu0 0
      %624 = vmatpush1.bf16.msra.mxu0 0
      %625 = vmatprep.subr.bf16.mxu0 0
      %626 = vmatpush1.bf16.msra.mxu0 0
      %627 = vmatprep.subr.bf16.mxu0 0
      %628 = vmatpush1.bf16.msra.mxu0 0
      %629 = vmatprep.subr.bf16.mxu0 0
      %630 = vmatpush1.bf16.msra.mxu0 0
      %631 = vmatprep.subr.bf16.mxu0 0
      %632 = vmatpush1.bf16.msra.mxu0 0
      %633 = vmatprep.subr.bf16.mxu0 %v576
      %634 = vmatpush1.bf16.msra.mxu0 %v573
      %635 = vmatprep.subr.bf16.mxu0 0
      %636 = vmatpush2.bf16.msra.mxu0 0
      %637 = vmatprep.subr.bf16.mxu0 0
      %638 = vmatpush2.bf16.msra.mxu0 0
      %639 = vmatprep.subr.bf16.mxu0 0
      %640 = vmatpush2.bf16.msra.mxu0 0
      %641 = vmatprep.subr.bf16.mxu0 0
      %642 = vmatpush2.bf16.msra.mxu0 0
      %643 = vmatprep.subr.bf16.mxu0 0
      %644 = vmatpush2.bf16.msra.mxu0 0
      %645 = vmatprep.subr.bf16.mxu0 0
      %646 = vmatpush2.bf16.msra.mxu0 0
      %647 = vmatprep.subr.bf16.mxu0 0
      %648 = vmatpush2.bf16.msra.mxu0 0
      %649 = vmatprep.subr.bf16.mxu0 0
      %650 = vmatpush2.bf16.msra.mxu0 0
      %651 = vmatprep.mubr.bf16.mxu0 0
      %652 = vmatmul.mubr.bf16.gmra.mxu0 %v563
      %v653 = vpop.f32.mrf.mxu0
      %v654 = vadd.f32 0.0, %v653
      %v655 = vpop.f32.mrf.mxu0
      %v656 = vadd.f32 0.0, %v655
      %v657 = vpop.f32.mrf.mxu0
      %v658 = vpop.f32.mrf.mxu0
      %659 = vdwg.mxu0
      %v668 = vunpack.c.l.b16 %v460
      %v669 = vunpack.c.l.b16 %v461
      %v670 = vunpack.c.l.b16 %v462
      %v671 = vunpack.c.l.b16 %v463
      %v672 = vunpack.c.l.b16 %v464
      %v673 = vunpack.c.l.b16 %v465
      %v674 = vunpack.c.l.b16 %v466
      %v675 = vunpack.c.l.b16 %v467
      %v676 = vlaneseq
      %v677 = vshrl.u32 %v676, 7
      %v678 = vsub.s32 %v495, %v677
      %v679 = vrot.slane %v668, %v678
      %v680 = vlaneseq
      %v681 = vshrl.u32 %v680, 7
      %v682 = vsub.s32 %v495, %v681
      %v683 = vrot.slane %v669, %v682
      %v684 = vlaneseq
      %v685 = vshrl.u32 %v684, 7
      %v686 = vsub.s32 %v495, %v685
      %v687 = vrot.slane %v670, %v686
      %v688 = vlaneseq
      %v689 = vshrl.u32 %v688, 7
      %v690 = vsub.s32 %v495, %v689
      %v691 = vrot.slane %v671, %v690
      %v692 = vlaneseq
      %v693 = vshrl.u32 %v692, 7
      %v694 = vsub.s32 %v495, %v693
      %v695 = vrot.slane %v672, %v694
      %v696 = vlaneseq
      %v697 = vshrl.u32 %v696, 7
      %v698 = vsub.s32 %v495, %v697
      %v699 = vrot.slane %v673, %v698
      %v700 = vlaneseq
      %v701 = vshrl.u32 %v700, 7
      %v702 = vsub.s32 %v495, %v701
      %v703 = vrot.slane %v674, %v702
      %v704 = vlaneseq
      %v705 = vshrl.u32 %v704, 7
      %v706 = vsub.s32 %v495, %v705
      %v707 = vrot.slane %v675, %v706
      %v708 = vsel %vm528, %v683, %v679
      %v709 = vsel %vm530, %v687, %v708
      %v710 = vsel %vm532, %v691, %v709
      %v711 = vsel %vm534, %v695, %v710
      %v712 = vsel %vm536, %v699, %v711
      %v713 = vsel %vm538, %v703, %v712
      %v714 = vsel %vm540, %v707, %v713
      %v715 = vpack.c.b16 %v714, %v714
      %v717 = vcombine.high %v468, %v468
      %v719 = vunpack.c.l.s4 1983009808
      %v720 = vunpack.c.0.s8 %v719
      %v721 = vlaneseq
      %v722 = vshrl.u32 %v721, 7
      %v723 = vsub.s32 %v720, %v722
      %v724 = vrot.slane %v468, %v723
      %v726 = vunpack.c.l.s4 1983009808
      %v727 = vunpack.c.0.s8 %v726
      %v728 = vlaneseq
      %v729 = vshrl.u32 %v728, 7
      %v730 = vsub.s32 %v727, %v729
      %v731 = vrot.slane %v717, %v730
      %v732 = vcombine.high %v724, %v724
      %v733 = vcombine.high %v731, %v731
      %v735 = vsel %vm561, %v715, 0
      %v738 = vsel %vm565, %v724, 0
      %v741 = vsel %vm565, %v732, 0
      %v744 = vsel %vm565, %v731, 0
      %v747 = vsel %vm565, %v733, 0
      %749 = vmatprep.subr.bf16.mxu0 0
      %750 = vmatpush1.bf16.msra.mxu0 0
      %751 = vmatprep.subr.bf16.mxu0 0
      %752 = vmatpush1.bf16.msra.mxu0 0
      %753 = vmatprep.subr.bf16.mxu0 0
      %754 = vmatpush1.bf16.msra.mxu0 0
      %755 = vmatprep.subr.bf16.mxu0 0
      %756 = vmatpush1.bf16.msra.mxu0 0
      %757 = vmatprep.subr.bf16.mxu0 0
      %758 = vmatpush1.bf16.msra.mxu0 0
      %759 = vmatprep.subr.bf16.mxu0 0
      %760 = vmatpush1.bf16.msra.mxu0 0
      %761 = vmatprep.subr.bf16.mxu0 0
      %762 = vmatpush1.bf16.msra.mxu0 0
      %763 = vmatprep.subr.bf16.mxu0 %v741
      %764 = vmatpush1.bf16.msra.mxu0 %v738
      %765 = vmatprep.subr.bf16.mxu0 0
      %766 = vmatpush2.bf16.msra.mxu0 0
      %767 = vmatprep.subr.bf16.mxu0 0
      %768 = vmatpush2.bf16.msra.mxu0 0
      %769 = vmatprep.subr.bf16.mxu0 0
      %770 = vmatpush2.bf16.msra.mxu0 0
      %771 = vmatprep.subr.bf16.mxu0 0
      %772 = vmatpush2.bf16.msra.mxu0 0
      %773 = vmatprep.subr.bf16.mxu0 0
      %774 = vmatpush2.bf16.msra.mxu0 0
      %775 = vmatprep.subr.bf16.mxu0 0
      %776 = vmatpush2.bf16.msra.mxu0 0
      %777 = vmatprep.subr.bf16.mxu0 0
      %778 = vmatpush2.bf16.msra.mxu0 0
      %779 = vmatprep.subr.bf16.mxu0 0
      %780 = vmatpush2.bf16.msra.mxu0 0
      %781 = vmatprep.mubr.bf16.mxu0 0
      %782 = vmatmul.mubr.bf16.gmra.mxu0 %v735
      %v783 = vpop.f32.mrf.mxu0
      %v784 = vadd.f32 %v613, %v783
      %v785 = vpop.f32.mrf.mxu0
      %v786 = vadd.f32 %v615, %v785
      %v787 = vpop.f32.mrf.mxu0
      %v788 = vpop.f32.mrf.mxu0
      %789 = vdwg.mxu0
      %790 = vmatprep.subr.bf16.mxu0 0
      %791 = vmatpush1.bf16.msra.mxu0 0
      %792 = vmatprep.subr.bf16.mxu0 0
      %793 = vmatpush1.bf16.msra.mxu0 0
      %794 = vmatprep.subr.bf16.mxu0 0
      %795 = vmatpush1.bf16.msra.mxu0 0
      %796 = vmatprep.subr.bf16.mxu0 0
      %797 = vmatpush1.bf16.msra.mxu0 0
      %798 = vmatprep.subr.bf16.mxu0 0
      %799 = vmatpush1.bf16.msra.mxu0 0
      %800 = vmatprep.subr.bf16.mxu0 0
      %801 = vmatpush1.bf16.msra.mxu0 0
      %802 = vmatprep.subr.bf16.mxu0 0
      %803 = vmatpush1.bf16.msra.mxu0 0
      %804 = vmatprep.subr.bf16.mxu0 %v747
      %805 = vmatpush1.bf16.msra.mxu0 %v744
      %806 = vmatprep.subr.bf16.mxu0 0
      %807 = vmatpush2.bf16.msra.mxu0 0
      %808 = vmatprep.subr.bf16.mxu0 0
      %809 = vmatpush2.bf16.msra.mxu0 0
      %810 = vmatprep.subr.bf16.mxu0 0
      %811 = vmatpush2.bf16.msra.mxu0 0
      %812 = vmatprep.subr.bf16.mxu0 0
      %813 = vmatpush2.bf16.msra.mxu0 0
      %814 = vmatprep.subr.bf16.mxu0 0
      %815 = vmatpush2.bf16.msra.mxu0 0
      %816 = vmatprep.subr.bf16.mxu0 0
      %817 = vmatpush2.bf16.msra.mxu0 0
      %818 = vmatprep.subr.bf16.mxu0 0
      %819 = vmatpush2.bf16.msra.mxu0 0
      %820 = vmatprep.subr.bf16.mxu0 0
      %821 = vmatpush2.bf16.msra.mxu0 0
      %822 = vmatprep.mubr.bf16.mxu0 0
      %823 = vmatmul.mubr.bf16.gmra.mxu0 %v735
      %v824 = vpop.f32.mrf.mxu0
      %v825 = vadd.f32 %v654, %v824
      %v826 = vpop.f32.mrf.mxu0
      %v827 = vadd.f32 %v656, %v826
      %v828 = vpop.f32.mrf.mxu0
      %v829 = vpop.f32.mrf.mxu0
      %830 = vdwg.mxu0
      %v831 = vld [vmem:[%s3] sm:$0xf]
      %v833 = vlaneseq
      %v834 = vshrl.u32 %v833, 7
      %v835 = vsub.s32 0, %v834
      %v836 = vrot.slane %v831, %v835
      %v837 = vlaneseq
      %v838 = vshrl.u32 %v837, 7
      %v839 = vsub.s32 1, %v838
      %v840 = vrot.slane %v831, %v839
      %v841 = vlaneseq
      %v842 = vshrl.u32 %v841, 7
      %v843 = vsub.s32 2, %v842
      %v844 = vrot.slane %v831, %v843
      %v845 = vlaneseq
      %v846 = vshrl.u32 %v845, 7
      %v847 = vsub.s32 3, %v846
      %v848 = vrot.slane %v831, %v847
      %v853 = vadd.f32 %v784, %v836
      %v854 = vadd.f32 %v786, %v840
      %v855 = vadd.f32 %v825, %v844
      %v856 = vadd.f32 %v827, %v848
      %v857 = vmin.f32 %v853, 20.0
      %v858 = vmin.f32 %v854, 20.0
      %v859 = vmin.f32 %v855, 20.0
      %v860 = vmin.f32 %v856, 20.0
      %v861 = vmul.f32 %v857, 1.442695
      %v862 = vpow.pop %v861
      %v863 = vmul.f32 %v858, 1.442695
      %v864 = vpow.pop %v863
      %v865 = vmul.f32 %v859, 1.442695
      %v866 = vpow.pop %v865
      %v867 = vmul.f32 %v860, 1.442695
      %v868 = vpow.pop %v867
      %v869 = vadd.f32 %v862, 2.0
      %v870 = vadd.f32 %v864, 2.0
      %v871 = vadd.f32 %v866, 2.0
      %v872 = vadd.f32 %v868, 2.0
      %v873 = vmul.f32 %v862, %v869
      %v874 = vmul.f32 %v864, %v870
      %v875 = vmul.f32 %v866, %v871
      %v876 = vmul.f32 %v868, %v872
      %v877 = vadd.f32 %v873, 2.0
      %v878 = vadd.f32 %v874, 2.0
      %v879 = vadd.f32 %v875, 2.0
      %v880 = vadd.f32 %v876, 2.0
      %v881 = vrcp.pop %v877
      %v882 = vrcp.pop %v878
      %v883 = vrcp.pop %v879
      %v884 = vrcp.pop %v880
      %v885 = vmul.f32 %v873, %v881
      %v886 = vmul.f32 %v874, %v882
      %v887 = vmul.f32 %v875, %v883
      %v888 = vmul.f32 %v876, %v884
      %vm889 = vcmp.gt.f32.partialorder %v853, 20.0
      %vm890 = vcmp.gt.f32.partialorder %v854, 20.0
      %vm891 = vcmp.gt.f32.partialorder %v855, 20.0
      %vm892 = vcmp.gt.f32.partialorder %v856, 20.0
      %v893 = vsel %vm889, 1.0, %v885
      %v894 = vsel %vm890, 1.0, %v886
      %v895 = vsel %vm891, 1.0, %v887
      %v896 = vsel %vm892, 1.0, %v888
      %v897 = vmul.f32 %v853, %v893
      %v898 = vmul.f32 %v854, %v894
      %v899 = vmul.f32 %v855, %v895
      %v900 = vmul.f32 %v856, %v896
      %v901 = vpack.c.bf16 %v897, %v897
      %v902 = vpack.c.bf16 %v898, %v898
      %v903 = vpack.c.bf16 %v899, %v899
      %v904 = vpack.c.bf16 %v900, %v900
      %v905 = vld [vmem:[#allocation10] sm:$0xf]
      %v906 = vld [vmem:[#allocation10 + $0x4] sm:$0xf]
      %v907 = vld [vmem:[#allocation10 + $0x8] sm:$0xf]
      %v908 = vld [vmem:[#allocation10 + $0xc] sm:$0xf]
      %v909 = vld [vmem:[#allocation10 + $0x10] sm:$0xf]
      %v910 = vld [vmem:[#allocation10 + $0x14] sm:$0xf]
      %v911 = vld [vmem:[#allocation10 + $0x18] sm:$0xf]
      %v912 = vld [vmem:[#allocation10 + $0x1c] sm:$0xf]
      %v913 = vld [vmem:[#allocation10 + $0x20] sm:$0xf]
      %v914 = vld [vmem:[#allocation10 + $0x24] sm:$0xf]
      %v915 = vld [vmem:[#allocation10 + $0x28] sm:$0xf]
      %v916 = vld [vmem:[#allocation10 + $0x2c] sm:$0xf]
      %v917 = vld [vmem:[#allocation10 + $0x30] sm:$0xf]
      %v918 = vld [vmem:[#allocation10 + $0x34] sm:$0xf]
      %v919 = vld [vmem:[#allocation10 + $0x38] sm:$0xf]
      %v920 = vld [vmem:[#allocation10 + $0x3c] sm:$0xf]
      %v921 = vld [vmem:[#allocation10 + $0x40] sm:$0xf]
      %v922 = vld [vmem:[#allocation10 + $0x44] sm:$0xf]
      %v923 = vld [vmem:[#allocation10 + $0x48] sm:$0xf]
      %v924 = vld [vmem:[#allocation10 + $0x4c] sm:$0xf]
      %v925 = vld [vmem:[#allocation10 + $0x50] sm:$0xf]
      %v926 = vld [vmem:[#allocation10 + $0x54] sm:$0xf]
      %v927 = vld [vmem:[#allocation10 + $0x58] sm:$0xf]
      %v928 = vld [vmem:[#allocation10 + $0x5c] sm:$0xf]
      %v929 = vld [vmem:[#allocation10 + $0x60] sm:$0xf]
      %v930 = vld [vmem:[#allocation10 + $0x64] sm:$0xf]
      %v931 = vld [vmem:[#allocation10 + $0x68] sm:$0xf]
      %v932 = vld [vmem:[#allocation10 + $0x6c] sm:$0xf]
      %v933 = vld [vmem:[#allocation10 + $0x70] sm:$0xf]
      %v934 = vld [vmem:[#allocation10 + $0x74] sm:$0xf]
      %v935 = vld [vmem:[#allocation10 + $0x78] sm:$0xf]
      %v936 = vld [vmem:[#allocation10 + $0x7c] sm:$0xf]
      %v937 = vld [vmem:[#allocation10 + $0x80] sm:$0xf]
      %v938 = vld [vmem:[#allocation10 + $0x84] sm:$0xf]
      %v939 = vld [vmem:[#allocation10 + $0x88] sm:$0xf]
      %v940 = vld [vmem:[#allocation10 + $0x8c] sm:$0xf]
      %v941 = vld [vmem:[#allocation10 + $0x90] sm:$0xf]
      %v942 = vld [vmem:[#allocation10 + $0x94] sm:$0xf]
      %v943 = vld [vmem:[#allocation10 + $0x98] sm:$0xf]
      %v944 = vld [vmem:[#allocation10 + $0x9c] sm:$0xf]
      %v945 = vld [vmem:[#allocation10 + $0xa0] sm:$0xf]
      %v946 = vld [vmem:[#allocation10 + $0xa4] sm:$0xf]
      %v947 = vld [vmem:[#allocation10 + $0xa8] sm:$0xf]
      %v948 = vld [vmem:[#allocation10 + $0xac] sm:$0xf]
      %v949 = vld [vmem:[#allocation10 + $0xb0] sm:$0xf]
      %v950 = vld [vmem:[#allocation10 + $0xb4] sm:$0xf]
      %v951 = vld [vmem:[#allocation10 + $0xb8] sm:$0xf]
      %v952 = vld [vmem:[#allocation10 + $0xbc] sm:$0xf]
      %v953 = vld [vmem:[#allocation10 + $0xc0] sm:$0xf]
      %v954 = vld [vmem:[#allocation10 + $0xc4] sm:$0xf]
      %v955 = vld [vmem:[#allocation10 + $0xc8] sm:$0xf]
      %v956 = vld [vmem:[#allocation10 + $0xcc] sm:$0xf]
      %v957 = vld [vmem:[#allocation10 + $0xd0] sm:$0xf]
      %v958 = vld [vmem:[#allocation10 + $0xd4] sm:$0xf]
      %v959 = vld [vmem:[#allocation10 + $0xd8] sm:$0xf]
      %v960 = vld [vmem:[#allocation10 + $0xdc] sm:$0xf]
      %v961 = vld [vmem:[#allocation10 + $0xe0] sm:$0xf]
      %v962 = vld [vmem:[#allocation10 + $0xe4] sm:$0xf]
      %v963 = vld [vmem:[#allocation10 + $0xe8] sm:$0xf]
      %v964 = vld [vmem:[#allocation10 + $0xec] sm:$0xf]
      %v965 = vld [vmem:[#allocation10 + $0xf0] sm:$0xf]
      %v966 = vld [vmem:[#allocation10 + $0xf4] sm:$0xf]
      %v967 = vld [vmem:[#allocation10 + $0xf8] sm:$0xf]
      %v968 = vld [vmem:[#allocation10 + $0xfc] sm:$0xf]
      %v969 = vld [vmem:[%s5] sm:$0x1]
      %v971 = vlaneseq
      %v972 = vshrl.u32 %v971, 7
      %v973 = vsub.s32 0, %v972
      %v974 = vrot.slane %v969, %v973
      %v1040 = vunpack.c.l.b16 %v905
      %v1041 = vunpack.c.l.b16 %v906
      %v1042 = vunpack.c.l.b16 %v907
      %v1043 = vunpack.c.l.b16 %v908
      %v1044 = vunpack.c.l.b16 %v909
      %v1045 = vunpack.c.l.b16 %v910
      %v1046 = vunpack.c.l.b16 %v911
      %v1047 = vunpack.c.l.b16 %v912
      %v1048 = vunpack.c.l.b16 %v913
      %v1049 = vunpack.c.l.b16 %v914
      %v1050 = vunpack.c.l.b16 %v915
      %v1051 = vunpack.c.l.b16 %v916
      %v1052 = vunpack.c.l.b16 %v917
      %v1053 = vunpack.c.l.b16 %v918
      %v1054 = vunpack.c.l.b16 %v919
      %v1055 = vunpack.c.l.b16 %v920
      %v1056 = vunpack.c.l.b16 %v921
      %v1057 = vunpack.c.l.b16 %v922
      %v1058 = vunpack.c.l.b16 %v923
      %v1059 = vunpack.c.l.b16 %v924
      %v1060 = vunpack.c.l.b16 %v925
      %v1061 = vunpack.c.l.b16 %v926
      %v1062 = vunpack.c.l.b16 %v927
      %v1063 = vunpack.c.l.b16 %v928
      %v1064 = vunpack.c.l.b16 %v929
      %v1065 = vunpack.c.l.b16 %v930
      %v1066 = vunpack.c.l.b16 %v931
      %v1067 = vunpack.c.l.b16 %v932
      %v1068 = vunpack.c.l.b16 %v933
      %v1069 = vunpack.c.l.b16 %v934
      %v1070 = vunpack.c.l.b16 %v935
      %v1071 = vunpack.c.l.b16 %v936
      %v1072 = vunpack.c.l.b16 %v937
      %v1073 = vunpack.c.l.b16 %v938
      %v1074 = vunpack.c.l.b16 %v939
      %v1075 = vunpack.c.l.b16 %v940
      %v1076 = vunpack.c.l.b16 %v941
      %v1077 = vunpack.c.l.b16 %v942
      %v1078 = vunpack.c.l.b16 %v943
      %v1079 = vunpack.c.l.b16 %v944
      %v1080 = vunpack.c.l.b16 %v945
      %v1081 = vunpack.c.l.b16 %v946
      %v1082 = vunpack.c.l.b16 %v947
      %v1083 = vunpack.c.l.b16 %v948
      %v1084 = vunpack.c.l.b16 %v949
      %v1085 = vunpack.c.l.b16 %v950
      %v1086 = vunpack.c.l.b16 %v951
      %v1087 = vunpack.c.l.b16 %v952
      %v1088 = vunpack.c.l.b16 %v953
      %v1089 = vunpack.c.l.b16 %v954
      %v1090 = vunpack.c.l.b16 %v955
      %v1091 = vunpack.c.l.b16 %v956
      %v1092 = vunpack.c.l.b16 %v957
      %v1093 = vunpack.c.l.b16 %v958
      %v1094 = vunpack.c.l.b16 %v959
      %v1095 = vunpack.c.l.b16 %v960
      %v1096 = vunpack.c.l.b16 %v961
      %v1097 = vunpack.c.l.b16 %v962
      %v1098 = vunpack.c.l.b16 %v963
      %v1099 = vunpack.c.l.b16 %v964
      %v1100 = vunpack.c.l.b16 %v965
      %v1101 = vunpack.c.l.b16 %v966
      %v1102 = vunpack.c.l.b16 %v967
      %v1103 = vunpack.c.l.b16 %v968
      %v1104 = vpack.c.b16 %v1041, %v1040
      %v1105 = vpack.c.b16 %v1043, %v1042
      %v1106 = vpack.c.b16 %v1045, %v1044
      %v1107 = vpack.c.b16 %v1047, %v1046
      %v1108 = vpack.c.b16 %v1049, %v1048
      %v1109 = vpack.c.b16 %v1051, %v1050
      %v1110 = vpack.c.b16 %v1053, %v1052
      %v1111 = vpack.c.b16 %v1055, %v1054
      %v1112 = vpack.c.b16 %v1057, %v1056
      %v1113 = vpack.c.b16 %v1059, %v1058
      %v1114 = vpack.c.b16 %v1061, %v1060
      %v1115 = vpack.c.b16 %v1063, %v1062
      %v1116 = vpack.c.b16 %v1065, %v1064
      %v1117 = vpack.c.b16 %v1067, %v1066
      %v1118 = vpack.c.b16 %v1069, %v1068
      %v1119 = vpack.c.b16 %v1071, %v1070
      %v1120 = vpack.c.b16 %v1073, %v1072
      %v1121 = vpack.c.b16 %v1075, %v1074
      %v1122 = vpack.c.b16 %v1077, %v1076
      %v1123 = vpack.c.b16 %v1079, %v1078
      %v1124 = vpack.c.b16 %v1081, %v1080
      %v1125 = vpack.c.b16 %v1083, %v1082
      %v1126 = vpack.c.b16 %v1085, %v1084
      %v1127 = vpack.c.b16 %v1087, %v1086
      %v1128 = vpack.c.b16 %v1089, %v1088
      %v1129 = vpack.c.b16 %v1091, %v1090
      %v1130 = vpack.c.b16 %v1093, %v1092
      %v1131 = vpack.c.b16 %v1095, %v1094
      %v1132 = vpack.c.b16 %v1097, %v1096
      %v1133 = vpack.c.b16 %v1099, %v1098
      %v1134 = vpack.c.b16 %v1101, %v1100
      %v1135 = vpack.c.b16 %v1103, %v1102
      %1168 = vmatprep.subr.bf16.mxu0 0
      %1169 = vmatpush1.bf16.msra.mxu0 %v1111
      %1170 = vmatprep.subr.bf16.mxu0 0
      %1171 = vmatpush1.bf16.msra.mxu0 %v1110
      %1172 = vmatprep.subr.bf16.mxu0 0
      %1173 = vmatpush1.bf16.msra.mxu0 %v1109
      %1174 = vmatprep.subr.bf16.mxu0 0
      %1175 = vmatpush1.bf16.msra.mxu0 %v1108
      %1176 = vmatprep.subr.bf16.mxu0 0
      %1177 = vmatpush1.bf16.msra.mxu0 %v1107
      %1178 = vmatprep.subr.bf16.mxu0 0
      %1179 = vmatpush1.bf16.msra.mxu0 %v1106
      %1180 = vmatprep.subr.bf16.mxu0 0
      %1181 = vmatpush1.bf16.msra.mxu0 %v1105
      %1182 = vmatprep.subr.bf16.mxu0 0
      %1183 = vmatpush1.bf16.msra.mxu0 %v1104
      %1184 = vmatprep.subr.bf16.mxu0 0
      %1185 = vmatpush2.bf16.msra.mxu0 %v1119
      %1186 = vmatprep.subr.bf16.mxu0 0
      %1187 = vmatpush2.bf16.msra.mxu0 %v1118
      %1188 = vmatprep.subr.bf16.mxu0 0
      %1189 = vmatpush2.bf16.msra.mxu0 %v1117
      %1190 = vmatprep.subr.bf16.mxu0 0
      %1191 = vmatpush2.bf16.msra.mxu0 %v1116
      %1192 = vmatprep.subr.bf16.mxu0 0
      %1193 = vmatpush2.bf16.msra.mxu0 %v1115
      %1194 = vmatprep.subr.bf16.mxu0 0
      %1195 = vmatpush2.bf16.msra.mxu0 %v1114
      %1196 = vmatprep.subr.bf16.mxu0 0
      %1197 = vmatpush2.bf16.msra.mxu0 %v1113
      %1198 = vmatprep.subr.bf16.mxu0 0
      %1199 = vmatpush2.bf16.msra.mxu0 %v1112
      %1200 = vmatprep.mubr.bf16.mxu0 %v902
      %1201 = vmatmul.mubr.bf16.gmra.mxu0 %v901
      %v1202 = vpop.f32.mrf.mxu0
      %v1203 = vadd.f32 %v974, %v1202
      %v1204 = vpop.f32.mrf.mxu0
      %v1205 = vpop.f32.mrf.mxu0
      %v1206 = vpop.f32.mrf.mxu0
      %1207 = vdwg.mxu0
      %1208 = vmatprep.subr.bf16.mxu0 0
      %1209 = vmatpush1.bf16.msra.mxu0 %v1127
      %1210 = vmatprep.subr.bf16.mxu0 0
      %1211 = vmatpush1.bf16.msra.mxu0 %v1126
      %1212 = vmatprep.subr.bf16.mxu0 0
      %1213 = vmatpush1.bf16.msra.mxu0 %v1125
      %1214 = vmatprep.subr.bf16.mxu0 0
      %1215 = vmatpush1.bf16.msra.mxu0 %v1124
      %1216 = vmatprep.subr.bf16.mxu0 0
      %1217 = vmatpush1.bf16.msra.mxu0 %v1123
      %1218 = vmatprep.subr.bf16.mxu0 0
      %1219 = vmatpush1.bf16.msra.mxu0 %v1122
      %1220 = vmatprep.subr.bf16.mxu0 0
      %1221 = vmatpush1.bf16.msra.mxu0 %v1121
      %1222 = vmatprep.subr.bf16.mxu0 0
      %1223 = vmatpush1.bf16.msra.mxu0 %v1120
      %1224 = vmatprep.subr.bf16.mxu0 0
      %1225 = vmatpush2.bf16.msra.mxu0 %v1135
      %1226 = vmatprep.subr.bf16.mxu0 0
      %1227 = vmatpush2.bf16.msra.mxu0 %v1134
      %1228 = vmatprep.subr.bf16.mxu0 0
      %1229 = vmatpush2.bf16.msra.mxu0 %v1133
      %1230 = vmatprep.subr.bf16.mxu0 0
      %1231 = vmatpush2.bf16.msra.mxu0 %v1132
      %1232 = vmatprep.subr.bf16.mxu0 0
      %1233 = vmatpush2.bf16.msra.mxu0 %v1131
      %1234 = vmatprep.subr.bf16.mxu0 0
      %1235 = vmatpush2.bf16.msra.mxu0 %v1130
      %1236 = vmatprep.subr.bf16.mxu0 0
      %1237 = vmatpush2.bf16.msra.mxu0 %v1129
      %1238 = vmatprep.subr.bf16.mxu0 0
      %1239 = vmatpush2.bf16.msra.mxu0 %v1128
      %1240 = vmatprep.mubr.bf16.mxu0 %v904
      %1241 = vmatmul.mubr.bf16.gmra.mxu0 %v903
      %v1242 = vpop.f32.mrf.mxu0
      %v1243 = vadd.f32 %v1203, %v1242
      %v1244 = vpop.f32.mrf.mxu0
      %v1245 = vpop.f32.mrf.mxu0
      %v1246 = vpop.f32.mrf.mxu0
      %1247 = vdwg.mxu0
      %1248 = vst [vmem:[#allocation12] sm:$0xff] %v1243
    $region49: #{tpu_custom_call.1} parent=1 // pred_fallthru
      _
    // Predicated region
    $region50: #{tpu_custom_call.1} parent=1 // pred_check
      _
    $region51: #{tpu_custom_call.1} parent=1 // pred_check_branch
      %1250 = sbr.rel (0) target = $region53
    $region52: #{tpu_custom_call.1} parent=1 // pred_region
      %s1252 = ssub.s32 128, 128
      %1253 = vsyncadd [#allocation6], %s1252
      %s1255 = sshll.u32 [#allocation12], 4
      %s1256 = int_to_ptr.vmem [resolvable:$true] %s1255
      %1258 = dma.vmem_to_hbm [thread:$0]  %s1256, 128, %s6, [#allocation6]
    $region53: #{tpu_custom_call.1} parent=1 // pred_fallthru
      _
    // Predicated region
    $region54: #{tpu_custom_call.1} parent=1 // pred_check
      _
    $region55: #{tpu_custom_call.1} parent=1 // pred_check_branch
      %1260 = sbr.rel (0) target = $region57
    $region56: #{tpu_custom_call.1} parent=1 // pred_region
      %1261 = dma.done [#allocation6], 128
    $region57: #{tpu_custom_call.1} parent=1 // pred_fallthru
      _
    %1262 = vsyncpa [#allocation5], 1
    %1263 = vsyncpa [#allocation8], 1
    %1264 = vsyncpa [#allocation11], 1
    %1265 = vsyncpa [#allocation6], 1

</llo_original>
